<compile_context>
chip_gen: v7x
topology: tpu7x:2x2x1
jax: 0.10.0
libtpu: 0.0.40
codegen_flags: <defaults>
</compile_context>

<pallas_src>
import math

import jax
import jax.numpy as jnp
from jax import lax
from jax.experimental import pallas as pl
from jax.experimental.pallas import tpu as pltpu

# Explicit scoped-VMEM budget: comfortably under v7x's 64 MiB physical VMEM and above
# the low defaults on v5e/v6e, so large attention tiles are not blocked by the default.
_VMEM_LIMIT_BYTES = 48 * 1024 * 1024


# ----------------------------------------------------------------------------
# Stage 1: GroupNorm + fused (pre-scaled) QKV projection. One batch per grid step
# (GroupNorm needs full-HW statistics).
# ----------------------------------------------------------------------------
def gn_qkv_kernel(x_ref, oh_cg_ref, oh_gc_ref, gamma_ref, beta_ref,
                  wqkv_ref, bqkv_ref, q_ref, k_ref, v_ref):
    x = x_ref[0]                                   # (HW, C) f32 (pre-norm input)
    HW, C = x.shape
    G = oh_cg_ref.shape[1]
    inv_n = 1.0 / (HW * (C // G))                  # 1 / (HW * group_size)

    # Per-group mean/var via small one-hot matmuls; no in-kernel transposes.
    oh_cg = oh_cg_ref[...]                         # (C, G) one-hot group membership
    oh_gc = oh_gc_ref[...]                         # (G, C) scatter back to channels

    colsum = jnp.sum(x, axis=0, keepdims=True)                                   # (1, C)
    gmean = jnp.dot(colsum, oh_cg, preferred_element_type=jnp.float32) * inv_n   # (1, G)
    mean_c = jnp.dot(gmean, oh_gc, preferred_element_type=jnp.float32)           # (1, C)

    xc = x - mean_c
    sqsum = jnp.sum(xc * xc, axis=0, keepdims=True)                              # (1, C)
    gvar = jnp.dot(sqsum, oh_cg, preferred_element_type=jnp.float32) * inv_n     # (1, G)
    var_c = jnp.dot(gvar, oh_gc, preferred_element_type=jnp.float32)             # (1, C)

    xn = xc * lax.rsqrt(var_c + 1e-6) * gamma_ref[...] + beta_ref[...]           # f32

    # Fused QKV projection: one (HW, C) @ (C, 3C) bf16 matmul, f32 accumulation.
    # The 1/sqrt(C) attention scale is already folded into the q-third of wqkv/bqkv.
    qkv = jnp.dot(xn.astype(jnp.bfloat16), wqkv_ref[...],
                  preferred_element_type=jnp.float32) + bqkv_ref[...]            # (HW, 3C)

    q_ref[0] = qkv[:, 0 * C:1 * C].astype(q_ref.dtype)
    k_ref[0] = qkv[:, 1 * C:2 * C].astype(k_ref.dtype)
    v_ref[0] = qkv[:, 2 * C:3 * C].astype(v_ref.dtype)


# ----------------------------------------------------------------------------
# Stage 2: flash attention over spatial positions + output projection + residual.
# Grid: (B, query tiles, kv tiles); kv is the innermost reduction axis.
# ----------------------------------------------------------------------------
def flash_out_kernel(q_ref, k_ref, v_ref, xres_ref, wo_ref, bo_ref, o_ref,
                     m_sc, l_sc, acc_sc):
    ki = pl.program_id(2)

    @pl.when(ki == 0)
    def _():
        m_sc[...] = jnp.full(m_sc.shape, -jnp.inf, m_sc.dtype)
        l_sc[...] = jnp.zeros(l_sc.shape, l_sc.dtype)
        acc_sc[...] = jnp.zeros(acc_sc.shape, acc_sc.dtype)

    q = q_ref[0]                                   # (tq, C) bf16, pre-scaled by 1/sqrt(C)
    k = k_ref[0]                                   # (tk, C) bf16
    v = v_ref[0]                                   # (tk, C) bf16

    # Scores: contract the feature dim of both operands (no explicit k.T through XLU).
    s = lax.dot_general(q, k, (((1,), (1,)), ((), ())),
                        preferred_element_type=jnp.float32)            # (tq, tk) f32

    # Online softmax; running max/sum/accumulator stay in f32.
    m_prev = m_sc[...]
    m_new = jnp.maximum(m_prev, jnp.max(s, axis=-1, keepdims=True))    # (tq, 1)
    alpha = jnp.exp(m_prev - m_new)
    p = jnp.exp(s - m_new)                                             # (tq, tk) f32
    l_sc[...] = alpha * l_sc[...] + jnp.sum(p, axis=-1, keepdims=True)
    acc_sc[...] = alpha * acc_sc[...] + jnp.dot(p.astype(jnp.bfloat16), v,
                                                preferred_element_type=jnp.float32)
    m_sc[...] = m_new

    @pl.when(ki == pl.num_programs(2) - 1)
    def _():
        z = acc_sc[...] * pl.reciprocal(l_sc[...], approx=True)        # (tq, C) f32
        z = jnp.dot(z.astype(jnp.bfloat16), wo_ref[...],
                    preferred_element_type=jnp.float32) + bo_ref[...]  # out 1x1 conv
        o_ref[0] = (xres_ref[0] + z).astype(o_ref.dtype)               # residual add


def _pick_tile(n, target):
    # `target` if it tiles n exactly, otherwise fall back to the full extent (no masking).
    if n <= target:
        return n
    return target if n % target == 0 else n


# ----------------------------------------------------------------------------
# Wrapper: NCHW in / NCHW out (matches PyTorch semantics).
# ----------------------------------------------------------------------------
def attention_block_pallas(x_nchw, params, *, tq=256, tk=512):
    B, C, H, W = x_nchw.shape
    HW = H * W
    G = 32
    cs = C // G
    scale = 1.0 / math.sqrt(C)

    # NCHW -> (B, HW, C) channels-last, f32.
    x = jnp.transpose(x_nchw, (0, 2, 3, 1)).reshape(B, HW, C).astype(jnp.float32)

    # One-hot group membership (C, G) and its transpose (G, C).
    gid = jnp.arange(C) // cs
    oh_cg = (gid[:, None] == jnp.arange(G)[None, :]).astype(jnp.float32)
    oh_gc = jnp.transpose(oh_cg)

    gamma = params["gamma"].reshape(1, C).astype(jnp.float32)
    beta = params["beta"].reshape(1, C).astype(jnp.float32)

    # Conv weights are (C_out, C_in): y = x @ W.T + b. Fuse q/k/v into one (C, 3C) bf16
    # weight; fold the 1/sqrt(C) attention scale into the q-third (free at runtime).
    wqkv = jnp.concatenate(
        [params["wq"].T * scale, params["wk"].T, params["wv"].T], axis=1
    ).astype(jnp.bfloat16)                                               # (C, 3C)
    bqkv = jnp.concatenate(
        [params["bq"] * scale, params["bk"], params["bv"]]
    ).reshape(1, 3 * C).astype(jnp.float32)                              # (1, 3C)
    wo_t = params["wo"].T.astype(jnp.bfloat16)                           # (C, C)
    bo = params["bo"].reshape(1, C).astype(jnp.float32)                  # (1, C)

    const = lambda shape: pl.BlockSpec(shape, lambda b, _s=shape: (0,) * len(_s))

    # ---------------- Stage 1: GroupNorm + fused QKV ----------------
    q, k, v = pl.pallas_call(
        gn_qkv_kernel,
        out_shape=tuple(jax.ShapeDtypeStruct((B, HW, C), jnp.bfloat16) for _ in range(3)),
        grid_spec=pltpu.PrefetchScalarGridSpec(
            num_scalar_prefetch=0,
            grid=(B,),
            in_specs=[
                pl.BlockSpec((1, HW, C), lambda b: (b, 0, 0)),    # x
                const((C, G)), const((G, C)),                     # one-hot group matrices
                const((1, C)), const((1, C)),                     # gamma, beta
                const((C, 3 * C)), const((1, 3 * C)),             # wqkv^T (bf16), bqkv
            ],
            out_specs=tuple(pl.BlockSpec((1, HW, C), lambda b: (b, 0, 0))
                            for _ in range(3)),
        ),
        compiler_params=pltpu.CompilerParams(
            dimension_semantics=("parallel",),
            vmem_limit_bytes=_VMEM_LIMIT_BYTES),
    )(x, oh_cg, oh_gc, gamma, beta, wqkv, bqkv)

    # ---------------- Stage 2: flash attention + out conv + residual ----------------
    tq_ = _pick_tile(HW, tq)
    tk_ = _pick_tile(HW, tk)
    nq, nk = HW // tq_, HW // tk_

    out = pl.pallas_call(
        flash_out_kernel,
        out_shape=jax.ShapeDtypeStruct((B, HW, C), jnp.float32),
        grid_spec=pltpu.PrefetchScalarGridSpec(
            num_scalar_prefetch=0,
            grid=(B, nq, nk),
            in_specs=[
                pl.BlockSpec((1, tq_, C), lambda b, qi, ki: (b, qi, 0)),  # q (bf16)
                pl.BlockSpec((1, tk_, C), lambda b, qi, ki: (b, ki, 0)),  # k (bf16)
                pl.BlockSpec((1, tk_, C), lambda b, qi, ki: (b, ki, 0)),  # v (bf16)
                pl.BlockSpec((1, tq_, C), lambda b, qi, ki: (b, qi, 0)),  # residual x
                pl.BlockSpec((C, C), lambda b, qi, ki: (0, 0)),           # wo^T (bf16)
                pl.BlockSpec((1, C), lambda b, qi, ki: (0, 0)),           # bo
            ],
            out_specs=pl.BlockSpec((1, tq_, C), lambda b, qi, ki: (b, qi, 0)),
            scratch_shapes=[
                pltpu.VMEM((tq_, 1), jnp.float32),   # running max
                pltpu.VMEM((tq_, 1), jnp.float32),   # running sum
                pltpu.VMEM((tq_, C), jnp.float32),   # output accumulator
            ],
        ),
        compiler_params=pltpu.CompilerParams(
            dimension_semantics=("parallel", "parallel", "arbitrary"),
            vmem_limit_bytes=_VMEM_LIMIT_BYTES),
    )(q, k, v, x, wo_t, bo)

    # (B, HW, C) -> NCHW
    return jnp.transpose(out.reshape(B, H, W, C), (0, 3, 1, 2)).astype(x_nchw.dtype)


# ----------------------------------------------------------------------------
# Pure-JAX reference (mirrors the PyTorch forward exactly, NCHW, f32).
# ----------------------------------------------------------------------------
def attention_block_ref(x, params):
    B, C, H, W = x.shape
    G = 32
    xg = x.reshape(B, G, C // G, H, W)
    mean = xg.mean(axis=(2, 3, 4), keepdims=True)
    var = ((xg - mean) ** 2).mean(axis=(2, 3, 4), keepdims=True)
    xn = ((xg - mean) / jnp.sqrt(var + 1e-6)).reshape(B, C, H, W)
    xn = xn * params["gamma"][None, :, None, None] + params["beta"][None, :, None, None]

    def conv1x1(t, w, b):
        return jnp.einsum("oc,bchw->bohw", w, t) + b[None, :, None, None]

    q = conv1x1(xn, params["wq"], params["bq"])
    k = conv1x1(xn, params["wk"], params["bk"])
    v = conv1x1(xn, params["wv"], params["bv"])

    q = q.reshape(B, C, H * W).transpose(0, 2, 1)      # (B, HW, C)
    k = k.reshape(B, C, H * W)                         # (B, C, HW)
    qk = jnp.matmul(q, k) / math.sqrt(C)               # (B, HW, HW)
    a = jax.nn.softmax(qk, axis=2)
    v = v.reshape(B, C, H * W)                         # (B, C, HW)
    z = jnp.matmul(v, a.transpose(0, 2, 1))            # (B, C, HW)
    z = z.reshape(B, C, H, W)
    z = conv1x1(z, params["wo"], params["bo"])
    return x + z


if __name__ == "__main__":
    # Small but lane-aligned shapes: C multiple of 128 (and of 32 for GroupNorm),
    # HW = 256 so the flash path runs with 2 query tiles x 2 kv tiles per batch.
    B, C, H, W = 2, 128, 16, 16

    key = jax.random.PRNGKey(0)
    keys = jax.random.split(key, 12)
    params = {
        "gamma": jax.random.normal(keys[0], (C,), jnp.float32) * 0.1 + 1.0,
        "beta":  jax.random.normal(keys[1], (C,), jnp.float32) * 0.1,
        "wq": jax.random.normal(keys[2], (C, C), jnp.float32) * 0.05,
        "bq": jax.random.normal(keys[3], (C,), jnp.float32) * 0.05,
        "wk": jax.random.normal(keys[4], (C, C), jnp.float32) * 0.05,
        "bk": jax.random.normal(keys[5], (C,), jnp.float32) * 0.05,
        "wv": jax.random.normal(keys[6], (C, C), jnp.float32) * 0.05,
        "bv": jax.random.normal(keys[7], (C,), jnp.float32) * 0.05,
        "wo": jax.random.normal(keys[8], (C, C), jnp.float32) * 0.05,
        "bo": jax.random.normal(keys[9], (C,), jnp.float32) * 0.05,
    }
    x = jax.random.normal(keys[10], (B, C, H, W), jnp.float32)

    out = attention_block_pallas(x, params, tq=128, tk=128)
    out = jax.block_until_ready(out)

    ref = attention_block_ref(x, params)
    assert out.shape == (B, C, H, W)
    max_err = float(jnp.max(jnp.abs(out - ref)))
    # bf16 matmul operands + approx reciprocal -> relaxed tolerance vs the f32 reference.
    assert jnp.allclose(out, ref, rtol=2e-2, atol=2e-2), max_err

    print("KERNEL_OK")
</pallas_src>

<mosaic_0001>
module attributes {stable_mosaic.version = 11 : i64} {
  func.func @gn_qkv_kernel(%arg0: i32, %arg1: memref<1x256x128xf32, #tpu.memory_space<vmem>>, %arg2: memref<128x32xf32, #tpu.memory_space<vmem>>, %arg3: memref<32x128xf32, #tpu.memory_space<vmem>>, %arg4: memref<1x128xf32, #tpu.memory_space<vmem>>, %arg5: memref<1x128xf32, #tpu.memory_space<vmem>>, %arg6: memref<128x384xbf16, #tpu.memory_space<vmem>>, %arg7: memref<1x384xf32, #tpu.memory_space<vmem>>, %arg8: memref<1x256x128xbf16, #tpu.memory_space<vmem>>, %arg9: memref<1x256x128xbf16, #tpu.memory_space<vmem>>, %arg10: memref<1x256x128xbf16, #tpu.memory_space<vmem>>) attributes {dimension_semantics = [#tpu.dimension_semantics<parallel>], iteration_bounds = array<i64: 2>, scalar_prefetch = 0 : i64, scratch_operands = 0 : i64, tpu.core_type = #tpu.core_type<tc>, window_params = [{transform_indices = @transform_0, window_bounds = array<i64: 1, 256, 128>}, {pipeline_mode = #tpu.pipeline_mode<synchronous>, transform_indices = @transform_1, window_bounds = array<i64: 128, 32>}, {pipeline_mode = #tpu.pipeline_mode<synchronous>, transform_indices = @transform_2, window_bounds = array<i64: 32, 128>}, {pipeline_mode = #tpu.pipeline_mode<synchronous>, transform_indices = @transform_3, window_bounds = array<i64: 1, 128>}, {pipeline_mode = #tpu.pipeline_mode<synchronous>, transform_indices = @transform_4, window_bounds = array<i64: 1, 128>}, {pipeline_mode = #tpu.pipeline_mode<synchronous>, transform_indices = @transform_5, window_bounds = array<i64: 128, 384>}, {pipeline_mode = #tpu.pipeline_mode<synchronous>, transform_indices = @transform_6, window_bounds = array<i64: 1, 384>}, {transform_indices = @transform_7, window_bounds = array<i64: 1, 256, 128>}, {transform_indices = @transform_8, window_bounds = array<i64: 1, 256, 128>}, {transform_indices = @transform_9, window_bounds = array<i64: 1, 256, 128>}]} {
    %c0 = arith.constant 0 : index
    %c0_0 = arith.constant 0 : index
    %c0_1 = arith.constant 0 : index
    %0 = vector.load %arg1[%c0, %c0_0, %c0_1] : memref<1x256x128xf32, #tpu.memory_space<vmem>>, vector<1x256x128xf32>
    %1 = vector.shape_cast %0 : vector<1x256x128xf32> to vector<256x128xf32>
    %c0_2 = arith.constant 0 : index
    %c0_3 = arith.constant 0 : index
    %2 = vector.load %arg2[%c0_2, %c0_3] : memref<128x32xf32, #tpu.memory_space<vmem>>, vector<128x32xf32>
    %c0_4 = arith.constant 0 : index
    %c0_5 = arith.constant 0 : index
    %3 = vector.load %arg3[%c0_4, %c0_5] : memref<32x128xf32, #tpu.memory_space<vmem>>, vector<32x128xf32>
    %cst = arith.constant dense<0.000000e+00> : vector<128xf32>
    %4 = vector.multi_reduction <add>, %1, %cst [0] : vector<256x128xf32> to vector<128xf32>
    %5 = vector.shape_cast %4 : vector<128xf32> to vector<1x128xf32>
    %cst_6 = arith.constant dense<0.000000e+00> : vector<1x32xf32>
    %6 = tpu.matmul %5, %2, %cst_6 {dimension_numbers = #tpu.dot_dimension_numbers<[1], [0], [0], [1], [0, 0, 1, 1], [], []>} : vector<1x128xf32>, vector<128x32xf32>, vector<1x32xf32> -> vector<1x32xf32>
    %cst_7 = arith.constant 9.765625E-4 : f32
    %7 = vector.broadcast %cst_7 : f32 to vector<1x32xf32>
    %8 = arith.mulf %6, %7 : vector<1x32xf32>
    %cst_8 = arith.constant dense<0.000000e+00> : vector<1x128xf32>
    %9 = tpu.matmul %8, %3, %cst_8 {dimension_numbers = #tpu.dot_dimension_numbers<[1], [0], [0], [1], [0, 0, 1, 1], [], []>} : vector<1x32xf32>, vector<32x128xf32>, vector<1x128xf32> -> vector<1x128xf32>
    %10 = vector.broadcast %9 : vector<1x128xf32> to vector<256x128xf32>
    %11 = arith.subf %1, %10 : vector<256x128xf32>
    %12 = arith.mulf %11, %11 : vector<256x128xf32>
    %cst_9 = arith.constant dense<0.000000e+00> : vector<128xf32>
    %13 = vector.multi_reduction <add>, %12, %cst_9 [0] : vector<256x128xf32> to vector<128xf32>
    %14 = vector.shape_cast %13 : vector<128xf32> to vector<1x128xf32>
    %cst_10 = arith.constant dense<0.000000e+00> : vector<1x32xf32>
    %15 = tpu.matmul %14, %2, %cst_10 {dimension_numbers = #tpu.dot_dimension_numbers<[1], [0], [0], [1], [0, 0, 1, 1], [], []>} : vector<1x128xf32>, vector<128x32xf32>, vector<1x32xf32> -> vector<1x32xf32>
    %cst_11 = arith.constant 9.765625E-4 : f32
    %16 = vector.broadcast %cst_11 : f32 to vector<1x32xf32>
    %17 = arith.mulf %15, %16 : vector<1x32xf32>
    %cst_12 = arith.constant dense<0.000000e+00> : vector<1x128xf32>
    %18 = tpu.matmul %17, %3, %cst_12 {dimension_numbers = #tpu.dot_dimension_numbers<[1], [0], [0], [1], [0, 0, 1, 1], [], []>} : vector<1x32xf32>, vector<32x128xf32>, vector<1x128xf32> -> vector<1x128xf32>
    %cst_13 = arith.constant 9.99999997E-7 : f32
    %19 = vector.broadcast %cst_13 : f32 to vector<1x128xf32>
    %20 = arith.addf %18, %19 : vector<1x128xf32>
    %21 = math.rsqrt %20 : vector<1x128xf32>
    %22 = vector.broadcast %21 : vector<1x128xf32> to vector<256x128xf32>
    %23 = arith.mulf %11, %22 : vector<256x128xf32>
    %c0_14 = arith.constant 0 : index
    %c0_15 = arith.constant 0 : index
    %24 = vector.load %arg4[%c0_14, %c0_15] : memref<1x128xf32, #tpu.memory_space<vmem>>, vector<1x128xf32>
    %25 = vector.broadcast %24 : vector<1x128xf32> to vector<256x128xf32>
    %26 = arith.mulf %23, %25 : vector<256x128xf32>
    %c0_16 = arith.constant 0 : index
    %c0_17 = arith.constant 0 : index
    %27 = vector.load %arg5[%c0_16, %c0_17] : memref<1x128xf32, #tpu.memory_space<vmem>>, vector<1x128xf32>
    %28 = vector.broadcast %27 : vector<1x128xf32> to vector<256x128xf32>
    %29 = arith.addf %26, %28 : vector<256x128xf32>
    %30 = arith.truncf %29 : vector<256x128xf32> to vector<256x128xbf16>
    %c0_18 = arith.constant 0 : index
    %c0_19 = arith.constant 0 : index
    %31 = vector.load %arg6[%c0_18, %c0_19] : memref<128x384xbf16, #tpu.memory_space<vmem>>, vector<128x384xbf16>
    %cst_20 = arith.constant dense<0.000000e+00> : vector<256x384xf32>
    %32 = tpu.matmul %30, %31, %cst_20 {dimension_numbers = #tpu.dot_dimension_numbers<[1], [0], [0], [1], [0, 0, 1, 1], [], []>} : vector<256x128xbf16>, vector<128x384xbf16>, vector<256x384xf32> -> vector<256x384xf32>
    %c0_21 = arith.constant 0 : index
    %c0_22 = arith.constant 0 : index
    %33 = vector.load %arg7[%c0_21, %c0_22] : memref<1x384xf32, #tpu.memory_space<vmem>>, vector<1x384xf32>
    %34 = vector.broadcast %33 : vector<1x384xf32> to vector<256x384xf32>
    %35 = arith.addf %32, %34 : vector<256x384xf32>
    %36 = vector.extract_strided_slice %35 {offsets = [0, 0], sizes = [256, 128], strides = [1, 1]} : vector<256x384xf32> to vector<256x128xf32>
    %37 = arith.truncf %36 : vector<256x128xf32> to vector<256x128xbf16>
    %c0_23 = arith.constant 0 : index
    %c0_24 = arith.constant 0 : index
    %c0_25 = arith.constant 0 : index
    %38 = vector.load %arg8[%c0_23, %c0_24, %c0_25] : memref<1x256x128xbf16, #tpu.memory_space<vmem>>, vector<1x256x128xbf16>
    %39 = vector.shape_cast %38 : vector<1x256x128xbf16> to vector<256x128xbf16>
    %40 = vector.shape_cast %37 : vector<256x128xbf16> to vector<1x256x128xbf16>
    tpu.vector_store %arg8[%c0_23, %c0_24, %c0_25], %40 {strides = array<i32>} : memref<1x256x128xbf16, #tpu.memory_space<vmem>>, vector<1x256x128xbf16>,
    %41 = vector.extract_strided_slice %35 {offsets = [0, 128], sizes = [256, 128], strides = [1, 1]} : vector<256x384xf32> to vector<256x128xf32>
    %42 = arith.truncf %41 : vector<256x128xf32> to vector<256x128xbf16>
    %c0_26 = arith.constant 0 : index
    %c0_27 = arith.constant 0 : index
    %c0_28 = arith.constant 0 : index
    %43 = vector.load %arg9[%c0_26, %c0_27, %c0_28] : memref<1x256x128xbf16, #tpu.memory_space<vmem>>, vector<1x256x128xbf16>
    %44 = vector.shape_cast %43 : vector<1x256x128xbf16> to vector<256x128xbf16>
    %45 = vector.shape_cast %42 : vector<256x128xbf16> to vector<1x256x128xbf16>
    tpu.vector_store %arg9[%c0_26, %c0_27, %c0_28], %45 {strides = array<i32>} : memref<1x256x128xbf16, #tpu.memory_space<vmem>>, vector<1x256x128xbf16>,
    %46 = vector.extract_strided_slice %35 {offsets = [0, 256], sizes = [256, 128], strides = [1, 1]} : vector<256x384xf32> to vector<256x128xf32>
    %47 = arith.truncf %46 : vector<256x128xf32> to vector<256x128xbf16>
    %c0_29 = arith.constant 0 : index
    %c0_30 = arith.constant 0 : index
    %c0_31 = arith.constant 0 : index
    %48 = vector.load %arg10[%c0_29, %c0_30, %c0_31] : memref<1x256x128xbf16, #tpu.memory_space<vmem>>, vector<1x256x128xbf16>
    %49 = vector.shape_cast %48 : vector<1x256x128xbf16> to vector<256x128xbf16>
    %50 = vector.shape_cast %47 : vector<256x128xbf16> to vector<1x256x128xbf16>
    tpu.vector_store %arg10[%c0_29, %c0_30, %c0_31], %50 {strides = array<i32>} : memref<1x256x128xbf16, #tpu.memory_space<vmem>>, vector<1x256x128xbf16>,
    return
  }
  func.func @transform_0(%arg0: i32) -> (i32, i32, i32) {
    %c0_i32 = arith.constant 0 : i32
    %c0_i32_0 = arith.constant 0 : i32
    %c0_i32_1 = arith.constant 0 : i32
    return %arg0, %c0_i32, %c0_i32_0 : i32, i32, i32
  }
  func.func @transform_1(%arg0: i32) -> (i32, i32) {
    %c0_i32 = arith.constant 0 : i32
    %c0_i32_0 = arith.constant 0 : i32
    %c0_i32_1 = arith.constant 0 : i32
    return %c0_i32, %c0_i32_0 : i32, i32
  }
  func.func @transform_2(%arg0: i32) -> (i32, i32) {
    %c0_i32 = arith.constant 0 : i32
    %c0_i32_0 = arith.constant 0 : i32
    %c0_i32_1 = arith.constant 0 : i32
    return %c0_i32, %c0_i32_0 : i32, i32
  }
  func.func @transform_3(%arg0: i32) -> (i32, i32) {
    %c0_i32 = arith.constant 0 : i32
    %c0_i32_0 = arith.constant 0 : i32
    %c0_i32_1 = arith.constant 0 : i32
    return %c0_i32, %c0_i32_0 : i32, i32
  }
  func.func @transform_4(%arg0: i32) -> (i32, i32) {
    %c0_i32 = arith.constant 0 : i32
    %c0_i32_0 = arith.constant 0 : i32
    %c0_i32_1 = arith.constant 0 : i32
    return %c0_i32, %c0_i32_0 : i32, i32
  }
  func.func @transform_5(%arg0: i32) -> (i32, i32) {
    %c0_i32 = arith.constant 0 : i32
    %c0_i32_0 = arith.constant 0 : i32
    %c0_i32_1 = arith.constant 0 : i32
    return %c0_i32, %c0_i32_0 : i32, i32
  }
  func.func @transform_6(%arg0: i32) -> (i32, i32) {
    %c0_i32 = arith.constant 0 : i32
    %c0_i32_0 = arith.constant 0 : i32
    %c0_i32_1 = arith.constant 0 : i32
    return %c0_i32, %c0_i32_0 : i32, i32
  }
  func.func @transform_7(%arg0: i32) -> (i32, i32, i32) {
    %c0_i32 = arith.constant 0 : i32
    %c0_i32_0 = arith.constant 0 : i32
    %c0_i32_1 = arith.constant 0 : i32
    return %arg0, %c0_i32, %c0_i32_0 : i32, i32, i32
  }
  func.func @transform_8(%arg0: i32) -> (i32, i32, i32) {
    %c0_i32 = arith.constant 0 : i32
    %c0_i32_0 = arith.constant 0 : i32
    %c0_i32_1 = arith.constant 0 : i32
    return %arg0, %c0_i32, %c0_i32_0 : i32, i32, i32
  }
  func.func @transform_9(%arg0: i32) -> (i32, i32, i32) {
    %c0_i32 = arith.constant 0 : i32
    %c0_i32_0 = arith.constant 0 : i32
    %c0_i32_1 = arith.constant 0 : i32
    return %arg0, %c0_i32, %c0_i32_0 : i32, i32, i32
  }
}

</mosaic_0001>

<llo_original>
// kernel: tpu_custom_call.1
$region0: #{tpu_custom_call.1}
  #allocation0 [shape = 'u32[]', space=smem, size = 0x4, offset = 0x4, fixed_abs, tag = 'smem constant byte address 0x4 - core index']
  #allocation1 [shape = 'u32[144,128]{1,0:T(1,128)}', space=vmem, size = 0x12000, scoped, tag = 'internal scratch']
  %s0 = inlined_call_operand.hbm [shape: f32[2,256,128], index: 0, kind: input, shape index: {}]
  %s1 = inlined_call_operand.vmem [shape: f32[128,32], index: 1, kind: input, shape index: {}]
  %s2 = inlined_call_operand.vmem [shape: f32[32,128], index: 2, kind: input, shape index: {}]
  %s3 = inlined_call_operand.vmem [shape: f32[1,128], index: 3, kind: input, shape index: {}]
  %s4 = inlined_call_operand.vmem [shape: f32[1,128], index: 4, kind: input, shape index: {}]
  %s5 = inlined_call_operand.hbm [shape: bf16[128,384], index: 5, kind: input, shape index: {}]
  %s6 = inlined_call_operand.vmem [shape: f32[1,384], index: 6, kind: input, shape index: {}]
  %s7 = inlined_call_operand.hbm [shape: bf16[2,256,128], index: 7, kind: output, shape index: {0}]
  %s8 = inlined_call_operand.hbm [shape: bf16[2,256,128], index: 8, kind: output, shape index: {1}]
  %s9 = inlined_call_operand.hbm [shape: bf16[2,256,128], index: 9, kind: output, shape index: {2}]
  %10 = xla_tuple %s7, %s8, %s9
  %s11 = sld [smem:[#allocation0]]
  $region85: #{tpu_custom_call.1} parent=0
    _
  %s13 = ssub.s32 1, %s11
  %s14 = scalar_select 0, %s13, %s11
  $region1: #{tpu_custom_call.1} parent=0
    #allocation2 [shape = 'u8[262144]{0}', space=vmem, size = 0x40000, scoped, tag = 'input window, operand 0']
    #allocation3 [shape = 's32[2]{0}', space=sflag, size = 0x8, scoped, tag = 'scoped memory for tpu_custom_call.1']
    #allocation4 [shape = 's32[2]{0}', space=sflag, size = 0x8, scoped, tag = 'scoped memory for tpu_custom_call.1']
    #allocation5 [shape = 'u8[98304]{0}', space=vmem, size = 0x18000, scoped, tag = 'input window, operand 5, single buffered']
    #allocation6 [shape = 's32[1]{0}', space=sflag, size = 0x4, scoped, tag = 'scoped memory for tpu_custom_call.1']
    #allocation7 [shape = 'u8[131072]{0}', space=vmem, size = 0x20000, scoped, tag = 'output window, operand 0']
    #allocation8 [shape = 'u8[131072]{0}', space=vmem, size = 0x20000, scoped, tag = 'output window, operand 1']
    #allocation9 [shape = 's32[2]{0}', space=sflag, size = 0x8, scoped, tag = 'scoped memory for tpu_custom_call.1']
    #allocation10 [shape = 'u8[131072]{0}', space=vmem, size = 0x20000, scoped, tag = 'output window, operand 2']
    %15 = vsyncpa [#allocation3], 0
    %s16 = scalar_lea.sflag [#allocation3], 1
    %17 = vsyncpa %s16, 0
    %18 = vsyncpa [#allocation6], 0
    %19 = vsyncpa [#allocation4], 0
    %s20 = scalar_lea.sflag [#allocation4], 1
    %21 = vsyncpa %s20, 0
    %22 = vsyncpa [#allocation9], 0
    %s23 = scalar_lea.sflag [#allocation9], 1
    %24 = vsyncpa %s23, 0
    loop: start=0, step=1, limit=4
    $region2: #{tpu_custom_call.1} parent=1 // loop_pre_header
      _
    $region3: #{tpu_custom_call.1} parent=1 // loop_header
      %s26 = sphi 0, %s30
      %p27 = scmp.ge.s32.totalorder %s26, 4
      %s36 = sphi 0, %s38
      %s39 = sphi 0, %s36
      %s40 = sphi 0, %s39
      %s56 = sphi 0, %s40
      %s60 = sphi 0, %s60
      %s62 = sphi 0, %s60
      %s63 = sphi 0, %s62
      %s77 = sphi 0, %s63
      %s81 = sphi 0, %s81
      %s83 = sphi 0, %s81
      %s84 = sphi 0, %s83
      %s98 = sphi 0, %s84
      %s102 = sphi 0, %s102
      %s104 = sphi 0, %s102
      %s105 = sphi 0, %s104
      %s119 = sphi 0, %s105
      %s123 = sphi 0, %s123
      %s125 = sphi 0, %s123
      %s126 = sphi 0, %s125
      %s140 = sphi 0, %s126
      %s144 = sphi 0, %s144
      %s146 = sphi 0, %s144
      %s147 = sphi 0, %s146
      %s161 = sphi 0, %s147
      %s165 = sphi 0, %s165
      %s167 = sphi 0, %s165
      %s168 = sphi 0, %s167
      %s182 = sphi 0, %s168
      %s188 = sphi 0, %s190
      %s191 = sphi 0, %s188
      %s192 = sphi 0, %s191
      %s208 = sphi 0, %s192
      %s214 = sphi 0, %s216
      %s217 = sphi 0, %s214
      %s218 = sphi 0, %s217
      %s234 = sphi 0, %s218
      %s240 = sphi 0, %s242
      %s243 = sphi 0, %s240
      %s244 = sphi 0, %s243
      %s260 = sphi 0, %s244
    $region4: #{tpu_custom_call.1} parent=1 // loop_header_branch
      %29 = sbr.rel (%p27) target = $region8
    $region5: #{tpu_custom_call.1} parent=1 // loop_body
      %s31 = ssub.s32 %s26, 1
      %s32 = ssub.s32 %s26, 2
      %s33 = sadd.s32 %s26, 1
      %s34 = ssub.s32 %s26, %s33
      %p35 = scmp.eq.s32.totalorder %s34, 0
      %s37 = sadd.s32 %s36, 1
      %s38 = scalar_select %p35, %s36, %s37
      %p41 = pneg %p35
      %p42 = scmp.eq.s32.totalorder %s26, 1
      %p43 = por %p41, %p42
      %p44 = scmp.ne.s32.totalorder %s36, %s39
      %p45 = scmp.eq.s32.totalorder %s26, 0
      %p46 = por %p44, %p45
      %p47 = scmp.ne.s32.totalorder %s36, %s39
      %p48 = scmp.eq.s32.totalorder %s31, 1
      %p49 = por %p47, %p48
      %p50 = scmp.ne.s32.totalorder %s39, %s40
      %p51 = scmp.eq.s32.totalorder %s31, 0
      %p52 = por %p50, %p51
      %p53 = scmp.ne.s32.totalorder %s39, %s40
      %p54 = scmp.eq.s32.totalorder %s32, 1
      %p55 = por %p53, %p54
      %p57 = scmp.ne.s32.totalorder %s40, %s56
      %p58 = scmp.eq.s32.totalorder %s32, 0
      %p59 = por %p57, %p58
      %s61 = sadd.s32 %s60, 1
      %p64 = scmp.eq.s32.totalorder %s26, 1
      %p65 = scmp.ne.s32.totalorder %s60, %s62
      %p66 = scmp.eq.s32.totalorder %s26, 0
      %p67 = por %p65, %p66
      %p68 = scmp.ne.s32.totalorder %s60, %s62
      %p69 = scmp.eq.s32.totalorder %s31, 1
      %p70 = por %p68, %p69
      %p71 = scmp.ne.s32.totalorder %s62, %s63
      %p72 = scmp.eq.s32.totalorder %s31, 0
      %p73 = por %p71, %p72
      %p74 = scmp.ne.s32.totalorder %s62, %s63
      %p75 = scmp.eq.s32.totalorder %s32, 1
      %p76 = por %p74, %p75
      %p78 = scmp.ne.s32.totalorder %s63, %s77
      %p79 = scmp.eq.s32.totalorder %s32, 0
      %p80 = por %p78, %p79
      %s82 = sadd.s32 %s81, 1
      %p85 = scmp.eq.s32.totalorder %s26, 1
      %p86 = scmp.ne.s32.totalorder %s81, %s83
      %p87 = scmp.eq.s32.totalorder %s26, 0
      %p88 = por %p86, %p87
      %p89 = scmp.ne.s32.totalorder %s81, %s83
      %p90 = scmp.eq.s32.totalorder %s31, 1
      %p91 = por %p89, %p90
      %p92 = scmp.ne.s32.totalorder %s83, %s84
      %p93 = scmp.eq.s32.totalorder %s31, 0
      %p94 = por %p92, %p93
      %p95 = scmp.ne.s32.totalorder %s83, %s84
      %p96 = scmp.eq.s32.totalorder %s32, 1
      %p97 = por %p95, %p96
      %p99 = scmp.ne.s32.totalorder %s84, %s98
      %p100 = scmp.eq.s32.totalorder %s32, 0
      %p101 = por %p99, %p100
      %s103 = sadd.s32 %s102, 1
      %p106 = scmp.eq.s32.totalorder %s26, 1
      %p107 = scmp.ne.s32.totalorder %s102, %s104
      %p108 = scmp.eq.s32.totalorder %s26, 0
      %p109 = por %p107, %p108
      %p110 = scmp.ne.s32.totalorder %s102, %s104
      %p111 = scmp.eq.s32.totalorder %s31, 1
      %p112 = por %p110, %p111
      %p113 = scmp.ne.s32.totalorder %s104, %s105
      %p114 = scmp.eq.s32.totalorder %s31, 0
      %p115 = por %p113, %p114
      %p116 = scmp.ne.s32.totalorder %s104, %s105
      %p117 = scmp.eq.s32.totalorder %s32, 1
      %p118 = por %p116, %p117
      %p120 = scmp.ne.s32.totalorder %s105, %s119
      %p121 = scmp.eq.s32.totalorder %s32, 0
      %p122 = por %p120, %p121
      %s124 = sadd.s32 %s123, 1
      %p127 = scmp.eq.s32.totalorder %s26, 1
      %p128 = scmp.ne.s32.totalorder %s123, %s125
      %p129 = scmp.eq.s32.totalorder %s26, 0
      %p130 = por %p128, %p129
      %p131 = scmp.ne.s32.totalorder %s123, %s125
      %p132 = scmp.eq.s32.totalorder %s31, 1
      %p133 = por %p131, %p132
      %p134 = scmp.ne.s32.totalorder %s125, %s126
      %p135 = scmp.eq.s32.totalorder %s31, 0
      %p136 = por %p134, %p135
      %p137 = scmp.ne.s32.totalorder %s125, %s126
      %p138 = scmp.eq.s32.totalorder %s32, 1
      %p139 = por %p137, %p138
      %p141 = scmp.ne.s32.totalorder %s126, %s140
      %p142 = scmp.eq.s32.totalorder %s32, 0
      %p143 = por %p141, %p142
      %s145 = sadd.s32 %s144, 1
      %p148 = scmp.eq.s32.totalorder %s26, 1
      %p149 = scmp.ne.s32.totalorder %s144, %s146
      %p150 = scmp.eq.s32.totalorder %s26, 0
      %p151 = por %p149, %p150
      %p152 = scmp.ne.s32.totalorder %s144, %s146
      %p153 = scmp.eq.s32.totalorder %s31, 1
      %p154 = por %p152, %p153
      %p155 = scmp.ne.s32.totalorder %s146, %s147
      %p156 = scmp.eq.s32.totalorder %s31, 0
      %p157 = por %p155, %p156
      %p158 = scmp.ne.s32.totalorder %s146, %s147
      %p159 = scmp.eq.s32.totalorder %s32, 1
      %p160 = por %p158, %p159
      %p162 = scmp.ne.s32.totalorder %s147, %s161
      %p163 = scmp.eq.s32.totalorder %s32, 0
      %p164 = por %p162, %p163
      %s166 = sadd.s32 %s165, 1
      %p169 = scmp.eq.s32.totalorder %s26, 1
      %p170 = scmp.ne.s32.totalorder %s165, %s167
      %p171 = scmp.eq.s32.totalorder %s26, 0
      %p172 = por %p170, %p171
      %p173 = scmp.ne.s32.totalorder %s165, %s167
      %p174 = scmp.eq.s32.totalorder %s31, 1
      %p175 = por %p173, %p174
      %p176 = scmp.ne.s32.totalorder %s167, %s168
      %p177 = scmp.eq.s32.totalorder %s31, 0
      %p178 = por %p176, %p177
      %p179 = scmp.ne.s32.totalorder %s167, %s168
      %p180 = scmp.eq.s32.totalorder %s32, 1
      %p181 = por %p179, %p180
      %p183 = scmp.ne.s32.totalorder %s168, %s182
      %p184 = scmp.eq.s32.totalorder %s32, 0
      %p185 = por %p183, %p184
      %s186 = ssub.s32 %s26, %s33
      %p187 = scmp.eq.s32.totalorder %s186, 0
      %s189 = sadd.s32 %s188, 1
      %s190 = scalar_select %p187, %s188, %s189
      %p193 = pneg %p187
      %p194 = scmp.eq.s32.totalorder %s26, 1
      %p195 = por %p193, %p194
      %p196 = scmp.ne.s32.totalorder %s188, %s191
      %p197 = scmp.eq.s32.totalorder %s26, 0
      %p198 = por %p196, %p197
      %p199 = scmp.ne.s32.totalorder %s188, %s191
      %p200 = scmp.eq.s32.totalorder %s31, 1
      %p201 = por %p199, %p200
      %p202 = scmp.ne.s32.totalorder %s191, %s192
      %p203 = scmp.eq.s32.totalorder %s31, 0
      %p204 = por %p202, %p203
      %p205 = scmp.ne.s32.totalorder %s191, %s192
      %p206 = scmp.eq.s32.totalorder %s32, 1
      %p207 = por %p205, %p206
      %p209 = scmp.ne.s32.totalorder %s192, %s208
      %p210 = scmp.eq.s32.totalorder %s32, 0
      %p211 = por %p209, %p210
      %s212 = ssub.s32 %s26, %s33
      %p213 = scmp.eq.s32.totalorder %s212, 0
      %s215 = sadd.s32 %s214, 1
      %s216 = scalar_select %p213, %s214, %s215
      %p219 = pneg %p213
      %p220 = scmp.eq.s32.totalorder %s26, 1
      %p221 = por %p219, %p220
      %p222 = scmp.ne.s32.totalorder %s214, %s217
      %p223 = scmp.eq.s32.totalorder %s26, 0
      %p224 = por %p222, %p223
      %p225 = scmp.ne.s32.totalorder %s214, %s217
      %p226 = scmp.eq.s32.totalorder %s31, 1
      %p227 = por %p225, %p226
      %p228 = scmp.ne.s32.totalorder %s217, %s218
      %p229 = scmp.eq.s32.totalorder %s31, 0
      %p230 = por %p228, %p229
      %p231 = scmp.ne.s32.totalorder %s217, %s218
      %p232 = scmp.eq.s32.totalorder %s32, 1
      %p233 = por %p231, %p232
      %p235 = scmp.ne.s32.totalorder %s218, %s234
      %p236 = scmp.eq.s32.totalorder %s32, 0
      %p237 = por %p235, %p236
      %s238 = ssub.s32 %s26, %s33
      %p239 = scmp.eq.s32.totalorder %s238, 0
      %s241 = sadd.s32 %s240, 1
      %s242 = scalar_select %p239, %s240, %s241
      %p245 = pneg %p239
      %p246 = scmp.eq.s32.totalorder %s26, 1
      %p247 = por %p245, %p246
      %p248 = scmp.ne.s32.totalorder %s240, %s243
      %p249 = scmp.eq.s32.totalorder %s26, 0
      %p250 = por %p248, %p249
      %p251 = scmp.ne.s32.totalorder %s240, %s243
      %p252 = scmp.eq.s32.totalorder %s31, 1
      %p253 = por %p251, %p252
      %p254 = scmp.ne.s32.totalorder %s243, %s244
      %p255 = scmp.eq.s32.totalorder %s31, 0
      %p256 = por %p254, %p255
      %p257 = scmp.ne.s32.totalorder %s243, %s244
      %p258 = scmp.eq.s32.totalorder %s32, 1
      %p259 = por %p257, %p258
      %p261 = scmp.ne.s32.totalorder %s244, %s260
      %p262 = scmp.eq.s32.totalorder %s32, 0
      %p263 = por %p261, %p262
      %p264 = scmp.le.s32.totalorder 1, %s26
      %p265 = scmp.lt.s32.totalorder %s26, 3
      %p266 = pnand %p264, %p265
      %p267 = pneg %p266
      // Predicated region
      $region9: #{tpu_custom_call.1} parent=5 // pred_check
        _
      $region10: #{tpu_custom_call.1} parent=5 // pred_check_branch
        %269 = sbr.rel (%p266) target = $region12
      $region11: #{tpu_custom_call.1} parent=5 // pred_region
        %s270 = ssub.s32 %s26, 1
        // Predicated region
        $region13: #{tpu_custom_call.1} parent=11 // pred_check
          %p271 = pneg %p73
        $region14: #{tpu_custom_call.1} parent=11 // pred_check_branch
          %273 = sbr.rel (%p271) target = $region16
        $region15: #{tpu_custom_call.1} parent=11 // pred_region
          _
        $region16: #{tpu_custom_call.1} parent=11 // pred_fallthru
          _
        // Predicated region
        $region17: #{tpu_custom_call.1} parent=11 // pred_check
          %p274 = pneg %p94
        $region18: #{tpu_custom_call.1} parent=11 // pred_check_branch
          %276 = sbr.rel (%p274) target = $region20
        $region19: #{tpu_custom_call.1} parent=11 // pred_region
          _
        $region20: #{tpu_custom_call.1} parent=11 // pred_fallthru
          _
        // Predicated region
        $region21: #{tpu_custom_call.1} parent=11 // pred_check
          %p277 = pneg %p115
        $region22: #{tpu_custom_call.1} parent=11 // pred_check_branch
          %279 = sbr.rel (%p277) target = $region24
        $region23: #{tpu_custom_call.1} parent=11 // pred_region
          _
        $region24: #{tpu_custom_call.1} parent=11 // pred_fallthru
          _
        // Predicated region
        $region25: #{tpu_custom_call.1} parent=11 // pred_check
          %p280 = pneg %p136
        $region26: #{tpu_custom_call.1} parent=11 // pred_check_branch
          %282 = sbr.rel (%p280) target = $region28
        $region27: #{tpu_custom_call.1} parent=11 // pred_region
          _
        $region28: #{tpu_custom_call.1} parent=11 // pred_fallthru
          _
        // Predicated region
        $region29: #{tpu_custom_call.1} parent=11 // pred_check
          %p283 = pneg %p157
        $region30: #{tpu_custom_call.1} parent=11 // pred_check_branch
          %285 = sbr.rel (%p283) target = $region32
        $region31: #{tpu_custom_call.1} parent=11 // pred_region
          %s287 = ssub.s32 3072, 3072
          %288 = vsyncadd [#allocation6], %s287
          %s289 = sshll.u32 [#allocation5], 4
          %s290 = int_to_ptr.vmem [resolvable:$true] %s289
          %295 = dma.hbm_to_vmem [thread:$0]  %s5, 3072, %s290, [#allocation6], 192, 192, 12
        $region32: #{tpu_custom_call.1} parent=11 // pred_fallthru
          _
        // Predicated region
        $region33: #{tpu_custom_call.1} parent=11 // pred_check
          %p296 = pneg %p178
        $region34: #{tpu_custom_call.1} parent=11 // pred_check_branch
          %298 = sbr.rel (%p296) target = $region36
        $region35: #{tpu_custom_call.1} parent=11 // pred_region
          _
        $region36: #{tpu_custom_call.1} parent=11 // pred_fallthru
          _
      $region12: #{tpu_custom_call.1} parent=5 // pred_fallthru
        _
      %p299 = scmp.lt.s32.totalorder %s26, 2
      // Predicated region
      $region37: #{tpu_custom_call.1} parent=5 // pred_check
        %p300 = pneg %p299
      $region38: #{tpu_custom_call.1} parent=5 // pred_check_branch
        %302 = sbr.rel (%p300) target = $region40
      $region39: #{tpu_custom_call.1} parent=5 // pred_region
        // Predicated region
        $region41: #{tpu_custom_call.1} parent=39 // pred_check
          %p303 = pneg %p46
        $region42: #{tpu_custom_call.1} parent=39 // pred_check_branch
          %305 = sbr.rel (%p303) target = $region44
        $region43: #{tpu_custom_call.1} parent=39 // pred_region
          %s306 = sand.u32 %s36, 1
          %s307 = scalar_lea.sflag [#allocation3], %s306
          %s308 = sand.u32 %s36, 1
          %s309 = smul.addr %s308, 256
          %s310 = scalar_lea.vmem [#allocation2], %s309
          %s312 = ssub.s32 4096, 4096
          %313 = vsyncadd %s307, %s312
          %s314 = smul.addr %s26, 32
          %s315 = smul.addr %s314, 128
          %s316 = scalar_lea.hbm %s0, %s315
          %s317 = sshll.u32 %s310, 4
          %s318 = int_to_ptr.vmem [resolvable:$true] %s317
          %323 = dma.hbm_to_vmem [thread:$0]  %s316, 4096, %s318, %s307, 128, 128, 8
        $region44: #{tpu_custom_call.1} parent=39 // pred_fallthru
          _
      $region40: #{tpu_custom_call.1} parent=5 // pred_fallthru
        _
      %p324 = scmp.le.s32.totalorder 1, %s26
      %p325 = scmp.lt.s32.totalorder %s26, 3
      %p326 = pnand %p324, %p325
      %p327 = pneg %p326
      // Predicated region
      $region45: #{tpu_custom_call.1} parent=5 // pred_check
        _
      $region46: #{tpu_custom_call.1} parent=5 // pred_check_branch
        %329 = sbr.rel (%p326) target = $region48
      $region47: #{tpu_custom_call.1} parent=5 // pred_region
        %s330 = ssub.s32 %s26, 1
        %s331 = sand.u32 %s39, 1
        %s332 = scalar_lea.sflag [#allocation3], %s331
        %s333 = sand.u32 %s39, 1
        %s334 = smul.addr %s333, 256
        %s335 = scalar_lea.vmem [#allocation2], %s334
        // Predicated region
        $region49: #{tpu_custom_call.1} parent=47 // pred_check
          %p336 = pneg %p52
        $region50: #{tpu_custom_call.1} parent=47 // pred_check_branch
          %338 = sbr.rel (%p336) target = $region52
        $region51: #{tpu_custom_call.1} parent=47 // pred_region
          %339 = dma.done %s332, 4096
        $region52: #{tpu_custom_call.1} parent=47 // pred_fallthru
          _
        // Predicated region
        $region53: #{tpu_custom_call.1} parent=47 // pred_check
          %p340 = pneg %p157
        $region54: #{tpu_custom_call.1} parent=47 // pred_check_branch
          %342 = sbr.rel (%p340) target = $region56
        $region55: #{tpu_custom_call.1} parent=47 // pred_region
          %343 = dma.done [#allocation6], 3072
        $region56: #{tpu_custom_call.1} parent=47 // pred_fallthru
          _
        %s344 = sand.u32 %s39, 1
        %s345 = scalar_lea.sflag [#allocation3], %s344
        %s346 = sand.u32 %s39, 1
        %s347 = smul.addr %s346, 256
        %s348 = scalar_lea.vmem [#allocation2], %s347
        %p349 = pneg %p52
        %p350 = pneg %p49
        %p351 = pneg %p73
        %p352 = pneg %p70
        %p353 = pneg %p94
        %p354 = pneg %p91
        %p355 = pneg %p115
        %p356 = pneg %p112
        %p357 = pneg %p136
        %p358 = pneg %p133
        %p359 = pneg %p157
        %p360 = pneg %p154
        %p361 = pneg %p178
        %p362 = pneg %p175
        %p363 = pneg %p204
        %p364 = pneg %p201
        %s365 = sand.u32 %s191, 1
        %s366 = scalar_lea.sflag [#allocation4], %s365
        %s367 = sand.u32 %s191, 1
        %s368 = smul.addr %s367, 128
        %s369 = scalar_lea.vmem [#allocation7], %s368
        %p370 = pneg %p230
        %p371 = pneg %p227
        %s372 = sand.u32 %s31, 1
        %s373 = scalar_lea.sflag [#allocation9], %s372
        %s374 = sand.u32 %s217, 1
        %s375 = smul.addr %s374, 128
        %s376 = scalar_lea.vmem [#allocation8], %s375
        %p377 = pneg %p256
        %p378 = pneg %p253
        %s379 = sand.u32 %s31, 1
        %s380 = scalar_lea.sflag [#allocation9], %s379
        %s381 = sand.u32 %s243, 1
        %s382 = smul.addr %s381, 128
        %s383 = scalar_lea.vmem [#allocation10], %s382
        %v385 = vld [vmem:[%s335] sm:$0xff]
        %v386 = vld [vmem:[%s335 + $0x8] sm:$0xff]
        %v387 = vld [vmem:[%s335 + $0x10] sm:$0xff]
        %v388 = vld [vmem:[%s335 + $0x18] sm:$0xff]
        %v389 = vld [vmem:[%s335 + $0x20] sm:$0xff]
        %v390 = vld [vmem:[%s335 + $0x28] sm:$0xff]
        %v391 = vld [vmem:[%s335 + $0x30] sm:$0xff]
        %v392 = vld [vmem:[%s335 + $0x38] sm:$0xff]
        %v393 = vld [vmem:[%s335 + $0x40] sm:$0xff]
        %v394 = vld [vmem:[%s335 + $0x48] sm:$0xff]
        %v395 = vld [vmem:[%s335 + $0x50] sm:$0xff]
        %v396 = vld [vmem:[%s335 + $0x58] sm:$0xff]
        %v397 = vld [vmem:[%s335 + $0x60] sm:$0xff]
        %v398 = vld [vmem:[%s335 + $0x68] sm:$0xff]
        %v399 = vld [vmem:[%s335 + $0x70] sm:$0xff]
        %v400 = vld [vmem:[%s335 + $0x78] sm:$0xff]
        %v401 = vld [vmem:[%s335 + $0x80] sm:$0xff]
        %v402 = vld [vmem:[%s335 + $0x88] sm:$0xff]
        %v403 = vld [vmem:[%s335 + $0x90] sm:$0xff]
        %v404 = vld [vmem:[%s335 + $0x98] sm:$0xff]
        %v405 = vld [vmem:[%s335 + $0xa0] sm:$0xff]
        %v406 = vld [vmem:[%s335 + $0xa8] sm:$0xff]
        %v407 = vld [vmem:[%s335 + $0xb0] sm:$0xff]
        %v408 = vld [vmem:[%s335 + $0xb8] sm:$0xff]
        %v409 = vld [vmem:[%s335 + $0xc0] sm:$0xff]
        %v410 = vld [vmem:[%s335 + $0xc8] sm:$0xff]
        %v411 = vld [vmem:[%s335 + $0xd0] sm:$0xff]
        %v412 = vld [vmem:[%s335 + $0xd8] sm:$0xff]
        %v413 = vld [vmem:[%s335 + $0xe0] sm:$0xff]
        %v414 = vld [vmem:[%s335 + $0xe8] sm:$0xff]
        %v415 = vld [vmem:[%s335 + $0xf0] sm:$0xff]
        %v416 = vld [vmem:[%s335 + $0xf8] sm:$0xff]
        %v417 = vld [vmem:[%s1] sm:$0xff]
        %v418 = vld [vmem:[%s1 + $0x8] sm:$0xff]
        %v419 = vld [vmem:[%s1 + $0x10] sm:$0xff]
        %v420 = vld [vmem:[%s1 + $0x18] sm:$0xff]
        %v421 = vld [vmem:[%s1 + $0x20] sm:$0xff]
        %v422 = vld [vmem:[%s1 + $0x28] sm:$0xff]
        %v423 = vld [vmem:[%s1 + $0x30] sm:$0xff]
        %v424 = vld [vmem:[%s1 + $0x38] sm:$0xff]
        %v425 = vld [vmem:[%s1 + $0x40] sm:$0xff]
        %v426 = vld [vmem:[%s1 + $0x48] sm:$0xff]
        %v427 = vld [vmem:[%s1 + $0x50] sm:$0xff]
        %v428 = vld [vmem:[%s1 + $0x58] sm:$0xff]
        %v429 = vld [vmem:[%s1 + $0x60] sm:$0xff]
        %v430 = vld [vmem:[%s1 + $0x68] sm:$0xff]
        %v431 = vld [vmem:[%s1 + $0x70] sm:$0xff]
        %v432 = vld [vmem:[%s1 + $0x78] sm:$0xff]
        %v433 = vld [vmem:[%s2] sm:$0xff]
        %v434 = vld [vmem:[%s2 + $0x8] sm:$0xff]
        %v435 = vld [vmem:[%s2 + $0x10] sm:$0xff]
        %v436 = vld [vmem:[%s2 + $0x18] sm:$0xff]
        %v437 = vadd.f32 %v385, %v386
        %v438 = vadd.f32 %v437, %v387
        %v439 = vadd.f32 %v438, %v388
        %v440 = vadd.f32 %v439, %v389
        %v441 = vadd.f32 %v440, %v390
        %v442 = vadd.f32 %v441, %v391
        %v443 = vadd.f32 %v442, %v392
        %v444 = vadd.f32 %v443, %v393
        %v445 = vadd.f32 %v444, %v394
        %v446 = vadd.f32 %v445, %v395
        %v447 = vadd.f32 %v446, %v396
        %v448 = vadd.f32 %v447, %v397
        %v449 = vadd.f32 %v448, %v398
        %v450 = vadd.f32 %v449, %v399
        %v451 = vadd.f32 %v450, %v400
        %v452 = vadd.f32 %v451, %v401
        %v453 = vadd.f32 %v452, %v402
        %v454 = vadd.f32 %v453, %v403
        %v455 = vadd.f32 %v454, %v404
        %v456 = vadd.f32 %v455, %v405
        %v457 = vadd.f32 %v456, %v406
        %v458 = vadd.f32 %v457, %v407
        %v459 = vadd.f32 %v458, %v408
        %v460 = vadd.f32 %v459, %v409
        %v461 = vadd.f32 %v460, %v410
        %v462 = vadd.f32 %v461, %v411
        %v463 = vadd.f32 %v462, %v412
        %v464 = vadd.f32 %v463, %v413
        %v465 = vadd.f32 %v464, %v414
        %v466 = vadd.f32 %v465, %v415
        %v467 = vadd.f32 %v466, %v416
        %v468 = vrot.slane %v467, 4
        %v469 = vadd.f32 %v467, %v468
        %v470 = vrot.slane %v469, 2
        %v471 = vadd.f32 %v469, %v470
        %v472 = vrot.slane %v471, 1
        %v473 = vadd.f32 %v471, %v472
        %474 = vmatprep.subr.mxu0 0.0
        %475 = vmatpush1.msra.mxu0 %v417
        %476 = vmatprep.subr.mxu0 0.0
        %477 = vmatpush1.msra.mxu0 %v418
        %478 = vmatprep.subr.mxu0 0.0
        %479 = vmatpush1.msra.mxu0 %v419
        %480 = vmatprep.subr.mxu0 0.0
        %481 = vmatpush1.msra.mxu0 %v420
        %482 = vmatprep.subr.mxu0 0.0
        %483 = vmatpush1.msra.mxu0 %v421
        %484 = vmatprep.subr.mxu0 0.0
        %485 = vmatpush1.msra.mxu0 %v422
        %486 = vmatprep.subr.mxu0 0.0
        %487 = vmatpush1.msra.mxu0 %v423
        %488 = vmatprep.subr.mxu0 0.0
        %489 = vmatpush1.msra.mxu0 %v424
        %490 = vmatprep.subr.mxu0 0.0
        %491 = vmatpush1.msra.mxu0 %v425
        %492 = vmatprep.subr.mxu0 0.0
        %493 = vmatpush1.msra.mxu0 %v426
        %494 = vmatprep.subr.mxu0 0.0
        %495 = vmatpush1.msra.mxu0 %v427
        %496 = vmatprep.subr.mxu0 0.0
        %497 = vmatpush1.msra.mxu0 %v428
        %498 = vmatprep.subr.mxu0 0.0
        %499 = vmatpush1.msra.mxu0 %v429
        %500 = vmatprep.subr.mxu0 0.0
        %501 = vmatpush1.msra.mxu0 %v430
        %502 = vmatprep.subr.mxu0 0.0
        %503 = vmatpush1.msra.mxu0 %v431
        %504 = vmatprep.subr.mxu0 0.0
        %505 = vmatpush1.msra.mxu0 %v432
        %506 = vmatprep.subr.mxu0 0.0
        %507 = vmatpush1.msra.mxu0 0.0
        %508 = vmatprep.subr.mxu0 0.0
        %509 = vmatpush1.msra.mxu0 0.0
        %510 = vmatprep.subr.mxu0 0.0
        %511 = vmatpush1.msra.mxu0 0.0
        %512 = vmatprep.subr.mxu0 0.0
        %513 = vmatpush1.msra.mxu0 0.0
        %514 = vmatprep.subr.mxu0 0.0
        %515 = vmatpush1.msra.mxu0 0.0
        %516 = vmatprep.subr.mxu0 0.0
        %517 = vmatpush1.msra.mxu0 0.0
        %518 = vmatprep.subr.mxu0 0.0
        %519 = vmatpush1.msra.mxu0 0.0
        %520 = vmatprep.subr.mxu0 0.0
        %521 = vmatpush1.msra.mxu0 0.0
        %522 = vmatprep.subr.mxu0 0.0
        %523 = vmatpush1.msra.mxu0 0.0
        %524 = vmatprep.subr.mxu0 0.0
        %525 = vmatpush1.msra.mxu0 0.0
        %526 = vmatprep.subr.mxu0 0.0
        %527 = vmatpush1.msra.mxu0 0.0
        %528 = vmatprep.subr.mxu0 0.0
        %529 = vmatpush1.msra.mxu0 0.0
        %530 = vmatprep.subr.mxu0 0.0
        %531 = vmatpush1.msra.mxu0 0.0
        %532 = vmatprep.subr.mxu0 0.0
        %533 = vmatpush1.msra.mxu0 0.0
        %534 = vmatprep.subr.mxu0 0.0
        %535 = vmatpush1.msra.mxu0 0.0
        %536 = vmatprep.subr.mxu0 0.0
        %537 = vmatpush1.msra.mxu0 0.0
        %538 = vmatprep.mubr.f32.mxu0 0.0
        %539 = vmatmul.mubr.f32.gmra.mrb[0].mxu0 %v473
        %v540 = vpop.f32.mrb[0].mxu0
        %v541 = vadd.f32 0.0, %v540
        %v542 = vpop.f32.mrb[0].mxu0
        %543 = vdwg.mxu0
        %v544 = vmul.f32 %v541, 0.0009765625
        %vm545 = vcmask 261120
        %v547 = vsel %vm545, %v544, 0
        %549 = vmatprep.subr.mxu0 0.0
        %550 = vmatpush1.msra.mxu0 %v433
        %551 = vmatprep.subr.mxu0 0.0
        %552 = vmatpush1.msra.mxu0 %v434
        %553 = vmatprep.subr.mxu0 0.0
        %554 = vmatpush1.msra.mxu0 %v435
        %555 = vmatprep.subr.mxu0 0.0
        %556 = vmatpush1.msra.mxu0 %v436
        %557 = vmatprep.subr.mxu0 0.0
        %558 = vmatpush1.msra.mxu0 0.0
        %559 = vmatprep.subr.mxu0 0.0
        %560 = vmatpush1.msra.mxu0 0.0
        %561 = vmatprep.subr.mxu0 0.0
        %562 = vmatpush1.msra.mxu0 0.0
        %563 = vmatprep.subr.mxu0 0.0
        %564 = vmatpush1.msra.mxu0 0.0
        %565 = vmatprep.subr.mxu0 0.0
        %566 = vmatpush1.msra.mxu0 0.0
        %567 = vmatprep.subr.mxu0 0.0
        %568 = vmatpush1.msra.mxu0 0.0
        %569 = vmatprep.subr.mxu0 0.0
        %570 = vmatpush1.msra.mxu0 0.0
        %571 = vmatprep.subr.mxu0 0.0
        %572 = vmatpush1.msra.mxu0 0.0
        %573 = vmatprep.subr.mxu0 0.0
        %574 = vmatpush1.msra.mxu0 0.0
        %575 = vmatprep.subr.mxu0 0.0
        %576 = vmatpush1.msra.mxu0 0.0
        %577 = vmatprep.subr.mxu0 0.0
        %578 = vmatpush1.msra.mxu0 0.0
        %579 = vmatprep.subr.mxu0 0.0
        %580 = vmatpush1.msra.mxu0 0.0
        %581 = vmatprep.subr.mxu0 0.0
        %582 = vmatpush1.msra.mxu0 0.0
        %583 = vmatprep.subr.mxu0 0.0
        %584 = vmatpush1.msra.mxu0 0.0
        %585 = vmatprep.subr.mxu0 0.0
        %586 = vmatpush1.msra.mxu0 0.0
        %587 = vmatprep.subr.mxu0 0.0
        %588 = vmatpush1.msra.mxu0 0.0
        %589 = vmatprep.subr.mxu0 0.0
        %590 = vmatpush1.msra.mxu0 0.0
        %591 = vmatprep.subr.mxu0 0.0
        %592 = vmatpush1.msra.mxu0 0.0
        %593 = vmatprep.subr.mxu0 0.0
        %594 = vmatpush1.msra.mxu0 0.0
        %595 = vmatprep.subr.mxu0 0.0
        %596 = vmatpush1.msra.mxu0 0.0
        %597 = vmatprep.subr.mxu0 0.0
        %598 = vmatpush1.msra.mxu0 0.0
        %599 = vmatprep.subr.mxu0 0.0
        %600 = vmatpush1.msra.mxu0 0.0
        %601 = vmatprep.subr.mxu0 0.0
        %602 = vmatpush1.msra.mxu0 0.0
        %603 = vmatprep.subr.mxu0 0.0
        %604 = vmatpush1.msra.mxu0 0.0
        %605 = vmatprep.subr.mxu0 0.0
        %606 = vmatpush1.msra.mxu0 0.0
        %607 = vmatprep.subr.mxu0 0.0
        %608 = vmatpush1.msra.mxu0 0.0
        %609 = vmatprep.subr.mxu0 0.0
        %610 = vmatpush1.msra.mxu0 0.0
        %611 = vmatprep.subr.mxu0 0.0
        %612 = vmatpush1.msra.mxu0 0.0
        %613 = vmatprep.mubr.f32.mxu0 0.0
        %614 = vmatmul.mubr.f32.gmra.mrb[0].mxu0 %v547
        %v615 = vpop.f32.mrb[0].mxu0
        %v616 = vadd.f32 0.0, %v615
        %v617 = vpop.f32.mrb[0].mxu0
        %618 = vdwg.mxu0
        %v619 = vlaneseq
        %v620 = vshrl.u32 %v619, 7
        %v621 = vsub.s32 0, %v620
        %v622 = vrot.slane %v616, %v621
        %v623 = vsub.f32 %v385, %v622
        %v624 = vsub.f32 %v386, %v622
        %v625 = vsub.f32 %v387, %v622
        %v626 = vsub.f32 %v388, %v622
        %v627 = vsub.f32 %v389, %v622
        %v628 = vsub.f32 %v390, %v622
        %v629 = vsub.f32 %v391, %v622
        %v630 = vsub.f32 %v392, %v622
        %v631 = vsub.f32 %v393, %v622
        %v632 = vsub.f32 %v394, %v622
        %v633 = vsub.f32 %v395, %v622
        %v634 = vsub.f32 %v396, %v622
        %v635 = vsub.f32 %v397, %v622
        %v636 = vsub.f32 %v398, %v622
        %v637 = vsub.f32 %v399, %v622
        %v638 = vsub.f32 %v400, %v622
        %v639 = vsub.f32 %v401, %v622
        %v640 = vsub.f32 %v402, %v622
        %v641 = vsub.f32 %v403, %v622
        %v642 = vsub.f32 %v404, %v622
        %v643 = vsub.f32 %v405, %v622
        %v644 = vsub.f32 %v406, %v622
        %v645 = vsub.f32 %v407, %v622
        %v646 = vsub.f32 %v408, %v622
        %v647 = vsub.f32 %v409, %v622
        %v648 = vsub.f32 %v410, %v622
        %v649 = vsub.f32 %v411, %v622
        %v650 = vsub.f32 %v412, %v622
        %v651 = vsub.f32 %v413, %v622
        %v652 = vsub.f32 %v414, %v622
        %v653 = vsub.f32 %v415, %v622
        %v654 = vsub.f32 %v416, %v622
        %v655 = vmul.f32 %v623, %v623
        %v656 = vmul.f32 %v624, %v624
        %v657 = vmul.f32 %v625, %v625
        %v658 = vmul.f32 %v626, %v626
        %v659 = vmul.f32 %v627, %v627
        %v660 = vmul.f32 %v628, %v628
        %v661 = vmul.f32 %v629, %v629
        %v662 = vmul.f32 %v630, %v630
        %v663 = vmul.f32 %v631, %v631
        %v664 = vmul.f32 %v632, %v632
        %v665 = vmul.f32 %v633, %v633
        %v666 = vmul.f32 %v634, %v634
        %v667 = vmul.f32 %v635, %v635
        %v668 = vmul.f32 %v636, %v636
        %v669 = vmul.f32 %v637, %v637
        %v670 = vmul.f32 %v638, %v638
        %v671 = vmul.f32 %v639, %v639
        %v672 = vmul.f32 %v640, %v640
        %v673 = vmul.f32 %v641, %v641
        %v674 = vmul.f32 %v642, %v642
        %v675 = vmul.f32 %v643, %v643
        %v676 = vmul.f32 %v644, %v644
        %v677 = vmul.f32 %v645, %v645
        %v678 = vmul.f32 %v646, %v646
        %v679 = vmul.f32 %v647, %v647
        %v680 = vmul.f32 %v648, %v648
        %v681 = vmul.f32 %v649, %v649
        %v682 = vmul.f32 %v650, %v650
        %v683 = vmul.f32 %v651, %v651
        %v684 = vmul.f32 %v652, %v652
        %v685 = vmul.f32 %v653, %v653
        %v686 = vmul.f32 %v654, %v654
        %v687 = vadd.f32 %v655, %v656
        %v688 = vadd.f32 %v687, %v657
        %v689 = vadd.f32 %v688, %v658
        %v690 = vadd.f32 %v689, %v659
        %v691 = vadd.f32 %v690, %v660
        %v692 = vadd.f32 %v691, %v661
        %v693 = vadd.f32 %v692, %v662
        %v694 = vadd.f32 %v693, %v663
        %v695 = vadd.f32 %v694, %v664
        %v696 = vadd.f32 %v695, %v665
        %v697 = vadd.f32 %v696, %v666
        %v698 = vadd.f32 %v697, %v667
        %v699 = vadd.f32 %v698, %v668
        %v700 = vadd.f32 %v699, %v669
        %v701 = vadd.f32 %v700, %v670
        %v702 = vadd.f32 %v701, %v671
        %v703 = vadd.f32 %v702, %v672
        %v704 = vadd.f32 %v703, %v673
        %v705 = vadd.f32 %v704, %v674
        %v706 = vadd.f32 %v705, %v675
        %v707 = vadd.f32 %v706, %v676
        %v708 = vadd.f32 %v707, %v677
        %v709 = vadd.f32 %v708, %v678
        %v710 = vadd.f32 %v709, %v679
        %v711 = vadd.f32 %v710, %v680
        %v712 = vadd.f32 %v711, %v681
        %v713 = vadd.f32 %v712, %v682
        %v714 = vadd.f32 %v713, %v683
        %v715 = vadd.f32 %v714, %v684
        %v716 = vadd.f32 %v715, %v685
        %v717 = vadd.f32 %v716, %v686
        %v718 = vrot.slane %v717, 4
        %v719 = vadd.f32 %v717, %v718
        %v720 = vrot.slane %v719, 2
        %v721 = vadd.f32 %v719, %v720
        %v722 = vrot.slane %v721, 1
        %v723 = vadd.f32 %v721, %v722
        %724 = vmatprep.subr.mxu0 0.0
        %725 = vmatpush1.msra.mxu0 %v417
        %726 = vmatprep.subr.mxu0 0.0
        %727 = vmatpush1.msra.mxu0 %v418
        %728 = vmatprep.subr.mxu0 0.0
        %729 = vmatpush1.msra.mxu0 %v419
        %730 = vmatprep.subr.mxu0 0.0
        %731 = vmatpush1.msra.mxu0 %v420
        %732 = vmatprep.subr.mxu0 0.0
        %733 = vmatpush1.msra.mxu0 %v421
        %734 = vmatprep.subr.mxu0 0.0
        %735 = vmatpush1.msra.mxu0 %v422
        %736 = vmatprep.subr.mxu0 0.0
        %737 = vmatpush1.msra.mxu0 %v423
        %738 = vmatprep.subr.mxu0 0.0
        %739 = vmatpush1.msra.mxu0 %v424
        %740 = vmatprep.subr.mxu0 0.0
        %741 = vmatpush1.msra.mxu0 %v425
        %742 = vmatprep.subr.mxu0 0.0
        %743 = vmatpush1.msra.mxu0 %v426
        %744 = vmatprep.subr.mxu0 0.0
        %745 = vmatpush1.msra.mxu0 %v427
        %746 = vmatprep.subr.mxu0 0.0
        %747 = vmatpush1.msra.mxu0 %v428
        %748 = vmatprep.subr.mxu0 0.0
        %749 = vmatpush1.msra.mxu0 %v429
        %750 = vmatprep.subr.mxu0 0.0
        %751 = vmatpush1.msra.mxu0 %v430
        %752 = vmatprep.subr.mxu0 0.0
        %753 = vmatpush1.msra.mxu0 %v431
        %754 = vmatprep.subr.mxu0 0.0
        %755 = vmatpush1.msra.mxu0 %v432
        %756 = vmatprep.subr.mxu0 0.0
        %757 = vmatpush1.msra.mxu0 0.0
        %758 = vmatprep.subr.mxu0 0.0
        %759 = vmatpush1.msra.mxu0 0.0
        %760 = vmatprep.subr.mxu0 0.0
        %761 = vmatpush1.msra.mxu0 0.0
        %762 = vmatprep.subr.mxu0 0.0
        %763 = vmatpush1.msra.mxu0 0.0
        %764 = vmatprep.subr.mxu0 0.0
        %765 = vmatpush1.msra.mxu0 0.0
        %766 = vmatprep.subr.mxu0 0.0
        %767 = vmatpush1.msra.mxu0 0.0
        %768 = vmatprep.subr.mxu0 0.0
        %769 = vmatpush1.msra.mxu0 0.0
        %770 = vmatprep.subr.mxu0 0.0
        %771 = vmatpush1.msra.mxu0 0.0
        %772 = vmatprep.subr.mxu0 0.0
        %773 = vmatpush1.msra.mxu0 0.0
        %774 = vmatprep.subr.mxu0 0.0
        %775 = vmatpush1.msra.mxu0 0.0
        %776 = vmatprep.subr.mxu0 0.0
        %777 = vmatpush1.msra.mxu0 0.0
        %778 = vmatprep.subr.mxu0 0.0
        %779 = vmatpush1.msra.mxu0 0.0
        %780 = vmatprep.subr.mxu0 0.0
        %781 = vmatpush1.msra.mxu0 0.0
        %782 = vmatprep.subr.mxu0 0.0
        %783 = vmatpush1.msra.mxu0 0.0
        %784 = vmatprep.subr.mxu0 0.0
        %785 = vmatpush1.msra.mxu0 0.0
        %786 = vmatprep.subr.mxu0 0.0
        %787 = vmatpush1.msra.mxu0 0.0
        %788 = vmatprep.mubr.f32.mxu0 0.0
        %789 = vmatmul.mubr.f32.gmra.mrb[0].mxu0 %v723
        %v790 = vpop.f32.mrb[0].mxu0
        %v791 = vadd.f32 0.0, %v790
        %v792 = vpop.f32.mrb[0].mxu0
        %793 = vdwg.mxu0
        %v794 = vmul.f32 %v791, 0.0009765625
        %v796 = vsel %vm545, %v794, 0
        %798 = vmatprep.subr.mxu0 0.0
        %799 = vmatpush1.msra.mxu0 %v433
        %800 = vmatprep.subr.mxu0 0.0
        %801 = vmatpush1.msra.mxu0 %v434
        %802 = vmatprep.subr.mxu0 0.0
        %803 = vmatpush1.msra.mxu0 %v435
        %804 = vmatprep.subr.mxu0 0.0
        %805 = vmatpush1.msra.mxu0 %v436
        %806 = vmatprep.subr.mxu0 0.0
        %807 = vmatpush1.msra.mxu0 0.0
        %808 = vmatprep.subr.mxu0 0.0
        %809 = vmatpush1.msra.mxu0 0.0
        %810 = vmatprep.subr.mxu0 0.0
        %811 = vmatpush1.msra.mxu0 0.0
        %812 = vmatprep.subr.mxu0 0.0
        %813 = vmatpush1.msra.mxu0 0.0
        %814 = vmatprep.subr.mxu0 0.0
        %815 = vmatpush1.msra.mxu0 0.0
        %816 = vmatprep.subr.mxu0 0.0
        %817 = vmatpush1.msra.mxu0 0.0
        %818 = vmatprep.subr.mxu0 0.0
        %819 = vmatpush1.msra.mxu0 0.0
        %820 = vmatprep.subr.mxu0 0.0
        %821 = vmatpush1.msra.mxu0 0.0
        %822 = vmatprep.subr.mxu0 0.0
        %823 = vmatpush1.msra.mxu0 0.0
        %824 = vmatprep.subr.mxu0 0.0
        %825 = vmatpush1.msra.mxu0 0.0
        %826 = vmatprep.subr.mxu0 0.0
        %827 = vmatpush1.msra.mxu0 0.0
        %828 = vmatprep.subr.mxu0 0.0
        %829 = vmatpush1.msra.mxu0 0.0
        %830 = vmatprep.subr.mxu0 0.0
        %831 = vmatpush1.msra.mxu0 0.0
        %832 = vmatprep.subr.mxu0 0.0
        %833 = vmatpush1.msra.mxu0 0.0
        %834 = vmatprep.subr.mxu0 0.0
        %835 = vmatpush1.msra.mxu0 0.0
        %836 = vmatprep.subr.mxu0 0.0
        %837 = vmatpush1.msra.mxu0 0.0
        %838 = vmatprep.subr.mxu0 0.0
        %839 = vmatpush1.msra.mxu0 0.0
        %840 = vmatprep.subr.mxu0 0.0
        %841 = vmatpush1.msra.mxu0 0.0
        %842 = vmatprep.subr.mxu0 0.0
        %843 = vmatpush1.msra.mxu0 0.0
        %844 = vmatprep.subr.mxu0 0.0
        %845 = vmatpush1.msra.mxu0 0.0
        %846 = vmatprep.subr.mxu0 0.0
        %847 = vmatpush1.msra.mxu0 0.0
        %848 = vmatprep.subr.mxu0 0.0
        %849 = vmatpush1.msra.mxu0 0.0
        %850 = vmatprep.subr.mxu0 0.0
        %851 = vmatpush1.msra.mxu0 0.0
        %852 = vmatprep.subr.mxu0 0.0
        %853 = vmatpush1.msra.mxu0 0.0
        %854 = vmatprep.subr.mxu0 0.0
        %855 = vmatpush1.msra.mxu0 0.0
        %856 = vmatprep.subr.mxu0 0.0
        %857 = vmatpush1.msra.mxu0 0.0
        %858 = vmatprep.subr.mxu0 0.0
        %859 = vmatpush1.msra.mxu0 0.0
        %860 = vmatprep.subr.mxu0 0.0
        %861 = vmatpush1.msra.mxu0 0.0
        %862 = vmatprep.mubr.f32.mxu0 0.0
        %863 = vmatmul.mubr.f32.gmra.mrb[0].mxu0 %v796
        %v864 = vpop.f32.mrb[0].mxu0
        %v865 = vadd.f32 1e-06, %v864
        %v866 = vpop.f32.mrb[0].mxu0
        %867 = vdwg.mxu0
        %v868 = vrsqrt.pop %v865
        %v869 = vlaneseq
        %v870 = vshrl.u32 %v869, 7
        %v871 = vsub.s32 0, %v870
        %v872 = vrot.slane %v868, %v871
        %v873 = vmul.f32 %v623, %v872
        %v874 = vmul.f32 %v624, %v872
        %v875 = vmul.f32 %v625, %v872
        %v876 = vmul.f32 %v626, %v872
        %v877 = vmul.f32 %v627, %v872
        %v878 = vmul.f32 %v628, %v872
        %v879 = vmul.f32 %v629, %v872
        %v880 = vmul.f32 %v630, %v872
        %v881 = vmul.f32 %v631, %v872
        %v882 = vmul.f32 %v632, %v872
        %v883 = vmul.f32 %v633, %v872
        %v884 = vmul.f32 %v634, %v872
        %v885 = vmul.f32 %v635, %v872
        %v886 = vmul.f32 %v636, %v872
        %v887 = vmul.f32 %v637, %v872
        %v888 = vmul.f32 %v638, %v872
        %v889 = vmul.f32 %v639, %v872
        %v890 = vmul.f32 %v640, %v872
        %v891 = vmul.f32 %v641, %v872
        %v892 = vmul.f32 %v642, %v872
        %v893 = vmul.f32 %v643, %v872
        %v894 = vmul.f32 %v644, %v872
        %v895 = vmul.f32 %v645, %v872
        %v896 = vmul.f32 %v646, %v872
        %v897 = vmul.f32 %v647, %v872
        %v898 = vmul.f32 %v648, %v872
        %v899 = vmul.f32 %v649, %v872
        %v900 = vmul.f32 %v650, %v872
        %v901 = vmul.f32 %v651, %v872
        %v902 = vmul.f32 %v652, %v872
        %v903 = vmul.f32 %v653, %v872
        %v904 = vmul.f32 %v654, %v872
        %v905 = vld [vmem:[%s3] sm:$0x1]
        %v907 = vlaneseq
        %v908 = vshrl.u32 %v907, 7
        %v909 = vsub.s32 0, %v908
        %v910 = vrot.slane %v905, %v909
        %v912 = vmul.f32 %v873, %v910
        %v913 = vmul.f32 %v874, %v910
        %v914 = vmul.f32 %v875, %v910
        %v915 = vmul.f32 %v876, %v910
        %v916 = vmul.f32 %v877, %v910
        %v917 = vmul.f32 %v878, %v910
        %v918 = vmul.f32 %v879, %v910
        %v919 = vmul.f32 %v880, %v910
        %v920 = vmul.f32 %v881, %v910
        %v921 = vmul.f32 %v882, %v910
        %v922 = vmul.f32 %v883, %v910
        %v923 = vmul.f32 %v884, %v910
        %v924 = vmul.f32 %v885, %v910
        %v925 = vmul.f32 %v886, %v910
        %v926 = vmul.f32 %v887, %v910
        %v927 = vmul.f32 %v888, %v910
        %v928 = vmul.f32 %v889, %v910
        %v929 = vmul.f32 %v890, %v910
        %v930 = vmul.f32 %v891, %v910
        %v931 = vmul.f32 %v892, %v910
        %v932 = vmul.f32 %v893, %v910
        %v933 = vmul.f32 %v894, %v910
        %v934 = vmul.f32 %v895, %v910
        %v935 = vmul.f32 %v896, %v910
        %v936 = vmul.f32 %v897, %v910
        %v937 = vmul.f32 %v898, %v910
        %v938 = vmul.f32 %v899, %v910
        %v939 = vmul.f32 %v900, %v910
        %v940 = vmul.f32 %v901, %v910
        %v941 = vmul.f32 %v902, %v910
        %v942 = vmul.f32 %v903, %v910
        %v943 = vmul.f32 %v904, %v910
        %v944 = vld [vmem:[%s4] sm:$0x1]
        %v946 = vlaneseq
        %v947 = vshrl.u32 %v946, 7
        %v948 = vsub.s32 0, %v947
        %v949 = vrot.slane %v944, %v948
        %v951 = vadd.f32 %v912, %v949
        %v952 = vadd.f32 %v913, %v949
        %v953 = vadd.f32 %v914, %v949
        %v954 = vadd.f32 %v915, %v949
        %v955 = vadd.f32 %v916, %v949
        %v956 = vadd.f32 %v917, %v949
        %v957 = vadd.f32 %v918, %v949
        %v958 = vadd.f32 %v919, %v949
        %v959 = vadd.f32 %v920, %v949
        %v960 = vadd.f32 %v921, %v949
        %v961 = vadd.f32 %v922, %v949
        %v962 = vadd.f32 %v923, %v949
        %v963 = vadd.f32 %v924, %v949
        %v964 = vadd.f32 %v925, %v949
        %v965 = vadd.f32 %v926, %v949
        %v966 = vadd.f32 %v927, %v949
        %v967 = vadd.f32 %v928, %v949
        %v968 = vadd.f32 %v929, %v949
        %v969 = vadd.f32 %v930, %v949
        %v970 = vadd.f32 %v931, %v949
        %v971 = vadd.f32 %v932, %v949
        %v972 = vadd.f32 %v933, %v949
        %v973 = vadd.f32 %v934, %v949
        %v974 = vadd.f32 %v935, %v949
        %v975 = vadd.f32 %v936, %v949
        %v976 = vadd.f32 %v937, %v949
        %v977 = vadd.f32 %v938, %v949
        %v978 = vadd.f32 %v939, %v949
        %v979 = vadd.f32 %v940, %v949
        %v980 = vadd.f32 %v941, %v949
        %v981 = vadd.f32 %v942, %v949
        %v982 = vadd.f32 %v943, %v949
        %v983 = vpack.c.bf16 %v952, %v951
        %v984 = vpack.c.bf16 %v954, %v953
        %v985 = vpack.c.bf16 %v956, %v955
        %v986 = vpack.c.bf16 %v958, %v957
        %v987 = vpack.c.bf16 %v960, %v959
        %v988 = vpack.c.bf16 %v962, %v961
        %v989 = vpack.c.bf16 %v964, %v963
        %v990 = vpack.c.bf16 %v966, %v965
        %v991 = vpack.c.bf16 %v968, %v967
        %v992 = vpack.c.bf16 %v970, %v969
        %v993 = vpack.c.bf16 %v972, %v971
        %v994 = vpack.c.bf16 %v974, %v973
        %v995 = vpack.c.bf16 %v976, %v975
        %v996 = vpack.c.bf16 %v978, %v977
        %v997 = vpack.c.bf16 %v980, %v979
        %v998 = vpack.c.bf16 %v982, %v981
        %v999 = vld [vmem:[#allocation5] sm:$0xff]
        %v1000 = vld [vmem:[#allocation5 + $0x8] sm:$0xf]
        %v1001 = vld [vmem:[#allocation5 + $0xc] sm:$0xff]
        %v1002 = vld [vmem:[#allocation5 + $0x14] sm:$0xf]
        %v1003 = vld [vmem:[#allocation5 + $0x18] sm:$0xff]
        %v1004 = vld [vmem:[#allocation5 + $0x20] sm:$0xf]
        %v1005 = vld [vmem:[#allocation5 + $0x24] sm:$0xff]
        %v1006 = vld [vmem:[#allocation5 + $0x2c] sm:$0xf]
        %v1007 = vld [vmem:[#allocation5 + $0x30] sm:$0xff]
        %v1008 = vld [vmem:[#allocation5 + $0x38] sm:$0xf]
        %v1009 = vld [vmem:[#allocation5 + $0x3c] sm:$0xff]
        %v1010 = vld [vmem:[#allocation5 + $0x44] sm:$0xf]
        %v1011 = vld [vmem:[#allocation5 + $0x48] sm:$0xff]
        %v1012 = vld [vmem:[#allocation5 + $0x50] sm:$0xf]
        %v1013 = vld [vmem:[#allocation5 + $0x54] sm:$0xff]
        %v1014 = vld [vmem:[#allocation5 + $0x5c] sm:$0xf]
        %v1015 = vld [vmem:[#allocation5 + $0x60] sm:$0xff]
        %v1016 = vld [vmem:[#allocation5 + $0x68] sm:$0xf]
        %v1017 = vld [vmem:[#allocation5 + $0x6c] sm:$0xff]
        %v1018 = vld [vmem:[#allocation5 + $0x74] sm:$0xf]
        %v1019 = vld [vmem:[#allocation5 + $0x78] sm:$0xff]
        %v1020 = vld [vmem:[#allocation5 + $0x80] sm:$0xf]
        %v1021 = vld [vmem:[#allocation5 + $0x84] sm:$0xff]
        %v1022 = vld [vmem:[#allocation5 + $0x8c] sm:$0xf]
        %v1023 = vld [vmem:[#allocation5 + $0x90] sm:$0xff]
        %v1024 = vld [vmem:[#allocation5 + $0x98] sm:$0xf]
        %v1025 = vld [vmem:[#allocation5 + $0x9c] sm:$0xff]
        %v1026 = vld [vmem:[#allocation5 + $0xa4] sm:$0xf]
        %v1027 = vld [vmem:[#allocation5 + $0xa8] sm:$0xff]
        %v1028 = vld [vmem:[#allocation5 + $0xb0] sm:$0xf]
        %v1029 = vld [vmem:[#allocation5 + $0xb4] sm:$0xff]
        %v1030 = vld [vmem:[#allocation5 + $0xbc] sm:$0xf]
        %v1031 = vld [vmem:[%s6] sm:$0x7]
        %v1033 = vlaneseq
        %v1034 = vshrl.u32 %v1033, 7
        %v1035 = vsub.s32 0, %v1034
        %v1036 = vrot.slane %v1031, %v1035
        %v1037 = vlaneseq
        %v1038 = vshrl.u32 %v1037, 7
        %v1039 = vsub.s32 1, %v1038
        %v1040 = vrot.slane %v1031, %v1039
        %v1041 = vlaneseq
        %v1042 = vshrl.u32 %v1041, 7
        %v1043 = vsub.s32 2, %v1042
        %v1044 = vrot.slane %v1031, %v1043
        %v1080 = vunpack.c.l.b16 %v999
        %v1081 = vunpack.c.h.b16 %v999
        %v1082 = vunpack.c.l.b16 %v1000
        %v1083 = vunpack.c.l.b16 %v1001
        %v1084 = vunpack.c.h.b16 %v1001
        %v1085 = vunpack.c.l.b16 %v1002
        %v1086 = vunpack.c.l.b16 %v1003
        %v1087 = vunpack.c.h.b16 %v1003
        %v1088 = vunpack.c.l.b16 %v1004
        %v1089 = vunpack.c.l.b16 %v1005
        %v1090 = vunpack.c.h.b16 %v1005
        %v1091 = vunpack.c.l.b16 %v1006
        %v1092 = vunpack.c.l.b16 %v1007
        %v1093 = vunpack.c.h.b16 %v1007
        %v1094 = vunpack.c.l.b16 %v1008
        %v1095 = vunpack.c.l.b16 %v1009
        %v1096 = vunpack.c.h.b16 %v1009
        %v1097 = vunpack.c.l.b16 %v1010
        %v1098 = vunpack.c.l.b16 %v1011
        %v1099 = vunpack.c.h.b16 %v1011
        %v1100 = vunpack.c.l.b16 %v1012
        %v1101 = vunpack.c.l.b16 %v1013
        %v1102 = vunpack.c.h.b16 %v1013
        %v1103 = vunpack.c.l.b16 %v1014
        %v1104 = vunpack.c.l.b16 %v1015
        %v1105 = vunpack.c.h.b16 %v1015
        %v1106 = vunpack.c.l.b16 %v1016
        %v1107 = vunpack.c.l.b16 %v1017
        %v1108 = vunpack.c.h.b16 %v1017
        %v1109 = vunpack.c.l.b16 %v1018
        %v1110 = vunpack.c.l.b16 %v1019
        %v1111 = vunpack.c.h.b16 %v1019
        %v1112 = vunpack.c.l.b16 %v1020
        %v1113 = vunpack.c.l.b16 %v1021
        %v1114 = vunpack.c.h.b16 %v1021
        %v1115 = vunpack.c.l.b16 %v1022
        %v1116 = vunpack.c.l.b16 %v1023
        %v1117 = vunpack.c.h.b16 %v1023
        %v1118 = vunpack.c.l.b16 %v1024
        %v1119 = vunpack.c.l.b16 %v1025
        %v1120 = vunpack.c.h.b16 %v1025
        %v1121 = vunpack.c.l.b16 %v1026
        %v1122 = vunpack.c.l.b16 %v1027
        %v1123 = vunpack.c.h.b16 %v1027
        %v1124 = vunpack.c.l.b16 %v1028
        %v1125 = vunpack.c.l.b16 %v1029
        %v1126 = vunpack.c.h.b16 %v1029
        %v1127 = vunpack.c.l.b16 %v1030
        %v1128 = vpack.c.b16 %v1083, %v1080
        %v1129 = vpack.c.b16 %v1084, %v1081
        %v1130 = vpack.c.b16 %v1085, %v1082
        %v1131 = vpack.c.b16 %v1089, %v1086
        %v1132 = vpack.c.b16 %v1090, %v1087
        %v1133 = vpack.c.b16 %v1091, %v1088
        %v1134 = vpack.c.b16 %v1095, %v1092
        %v1135 = vpack.c.b16 %v1096, %v1093
        %v1136 = vpack.c.b16 %v1097, %v1094
        %v1137 = vpack.c.b16 %v1101, %v1098
        %v1138 = vpack.c.b16 %v1102, %v1099
        %v1139 = vpack.c.b16 %v1103, %v1100
        %v1140 = vpack.c.b16 %v1107, %v1104
        %v1141 = vpack.c.b16 %v1108, %v1105
        %v1142 = vpack.c.b16 %v1109, %v1106
        %v1143 = vpack.c.b16 %v1113, %v1110
        %v1144 = vpack.c.b16 %v1114, %v1111
        %v1145 = vpack.c.b16 %v1115, %v1112
        %v1146 = vpack.c.b16 %v1119, %v1116
        %v1147 = vpack.c.b16 %v1120, %v1117
        %v1148 = vpack.c.b16 %v1121, %v1118
        %v1149 = vpack.c.b16 %v1125, %v1122
        %v1150 = vpack.c.b16 %v1126, %v1123
        %v1151 = vpack.c.b16 %v1127, %v1124
        %1176 = vmatprep.subr.bf16.mxu0 %v1129
        %1177 = vmatpush1.bf16.msra.mxu0 %v1128
        %1178 = vmatprep.subr.bf16.mxu0 %v1132
        %1179 = vmatpush1.bf16.msra.mxu0 %v1131
        %1180 = vmatprep.subr.bf16.mxu0 %v1135
        %1181 = vmatpush1.bf16.msra.mxu0 %v1134
        %1182 = vmatprep.subr.bf16.mxu0 %v1138
        %1183 = vmatpush1.bf16.msra.mxu0 %v1137
        %1184 = vmatprep.subr.bf16.mxu0 %v1141
        %1185 = vmatpush1.bf16.msra.mxu0 %v1140
        %1186 = vmatprep.subr.bf16.mxu0 %v1144
        %1187 = vmatpush1.bf16.msra.mxu0 %v1143
        %1188 = vmatprep.subr.bf16.mxu0 %v1147
        %1189 = vmatpush1.bf16.msra.mxu0 %v1146
        %1190 = vmatprep.subr.bf16.mxu0 %v1150
        %1191 = vmatpush1.bf16.msra.mxu0 %v1149
        %1192 = vmatprep.subr.bf16.mxu0 0
        %1193 = vmatpush1.bf16.msra.mxu0 0
        %1194 = vmatprep.subr.bf16.mxu0 0
        %1195 = vmatpush1.bf16.msra.mxu0 0
        %1196 = vmatprep.subr.bf16.mxu0 0
        %1197 = vmatpush1.bf16.msra.mxu0 0
        %1198 = vmatprep.subr.bf16.mxu0 0
        %1199 = vmatpush1.bf16.msra.mxu0 0
        %1200 = vmatprep.subr.bf16.mxu0 0
        %1201 = vmatpush1.bf16.msra.mxu0 0
        %1202 = vmatprep.subr.bf16.mxu0 0
        %1203 = vmatpush1.bf16.msra.mxu0 0
        %1204 = vmatprep.subr.bf16.mxu0 0
        %1205 = vmatpush1.bf16.msra.mxu0 0
        %1206 = vmatprep.subr.bf16.mxu0 0
        %1207 = vmatpush1.bf16.msra.mxu0 0
        %1208 = vmatprep.mubr.bf16.mxu0 0
        %1209 = vmatmul.mubr.bf16.gmra.mrb[0].mxu0 %v983
        %v1210 = vpop.f32.mrb[0].mxu0
        %v1211 = vadd.f32 %v1036, %v1210
        %v1212 = vpop.f32.mrb[0].mxu0
        %v1213 = vadd.f32 %v1040, %v1212
        %v1214 = vpop.f32.mrb[0].mxu0
        %v1215 = vadd.f32 %v1036, %v1214
        %v1216 = vpop.f32.mrb[0].mxu0
        %v1217 = vadd.f32 %v1040, %v1216
        %1218 = vmatprep.mubr.bf16.mxu0 0
        %1219 = vmatmul.mubr.bf16.gmra.mrb[0].mxu0 %v984
        %v1220 = vpop.f32.mrb[0].mxu0
        %v1221 = vadd.f32 %v1036, %v1220
        %v1222 = vpop.f32.mrb[0].mxu0
        %v1223 = vadd.f32 %v1040, %v1222
        %v1224 = vpop.f32.mrb[0].mxu0
        %v1225 = vadd.f32 %v1036, %v1224
        %v1226 = vpop.f32.mrb[0].mxu0
        %v1227 = vadd.f32 %v1040, %v1226
        %1228 = vmatprep.mubr.bf16.mxu0 0
        %1229 = vmatmul.mubr.bf16.gmra.mrb[0].mxu0 %v985
        %v1230 = vpop.f32.mrb[0].mxu0
        %v1231 = vadd.f32 %v1036, %v1230
        %v1232 = vpop.f32.mrb[0].mxu0
        %v1233 = vadd.f32 %v1040, %v1232
        %v1234 = vpop.f32.mrb[0].mxu0
        %v1235 = vadd.f32 %v1036, %v1234
        %v1236 = vpop.f32.mrb[0].mxu0
        %v1237 = vadd.f32 %v1040, %v1236
        %1238 = vmatprep.mubr.bf16.mxu0 0
        %1239 = vmatmul.mubr.bf16.gmra.mrb[0].mxu0 %v986
        %v1240 = vpop.f32.mrb[0].mxu0
        %v1241 = vadd.f32 %v1036, %v1240
        %v1242 = vpop.f32.mrb[0].mxu0
        %v1243 = vadd.f32 %v1040, %v1242
        %v1244 = vpop.f32.mrb[0].mxu0
        %v1245 = vadd.f32 %v1036, %v1244
        %v1246 = vpop.f32.mrb[0].mxu0
        %v1247 = vadd.f32 %v1040, %v1246
        %1248 = vmatprep.mubr.bf16.mxu0 0
        %1249 = vmatmul.mubr.bf16.gmra.mrb[0].mxu0 %v987
        %v1250 = vpop.f32.mrb[0].mxu0
        %v1251 = vadd.f32 %v1036, %v1250
        %v1252 = vpop.f32.mrb[0].mxu0
        %v1253 = vadd.f32 %v1040, %v1252
        %v1254 = vpop.f32.mrb[0].mxu0
        %v1255 = vadd.f32 %v1036, %v1254
        %v1256 = vpop.f32.mrb[0].mxu0
        %v1257 = vadd.f32 %v1040, %v1256
        %1258 = vmatprep.mubr.bf16.mxu0 0
        %1259 = vmatmul.mubr.bf16.gmra.mrb[0].mxu0 %v988
        %v1260 = vpop.f32.mrb[0].mxu0
        %v1261 = vadd.f32 %v1036, %v1260
        %v1262 = vpop.f32.mrb[0].mxu0
        %v1263 = vadd.f32 %v1040, %v1262
        %v1264 = vpop.f32.mrb[0].mxu0
        %v1265 = vadd.f32 %v1036, %v1264
        %v1266 = vpop.f32.mrb[0].mxu0
        %v1267 = vadd.f32 %v1040, %v1266
        %1268 = vmatprep.mubr.bf16.mxu0 0
        %1269 = vmatmul.mubr.bf16.gmra.mrb[0].mxu0 %v989
        %v1270 = vpop.f32.mrb[0].mxu0
        %v1271 = vadd.f32 %v1036, %v1270
        %v1272 = vpop.f32.mrb[0].mxu0
        %v1273 = vadd.f32 %v1040, %v1272
        %v1274 = vpop.f32.mrb[0].mxu0
        %v1275 = vadd.f32 %v1036, %v1274
        %v1276 = vpop.f32.mrb[0].mxu0
        %v1277 = vadd.f32 %v1040, %v1276
        %1278 = vmatprep.mubr.bf16.mxu0 0
        %1279 = vmatmul.mubr.bf16.gmra.mrb[0].mxu0 %v990
        %v1280 = vpop.f32.mrb[0].mxu0
        %v1281 = vadd.f32 %v1036, %v1280
        %v1282 = vpop.f32.mrb[0].mxu0
        %v1283 = vadd.f32 %v1040, %v1282
        %v1284 = vpop.f32.mrb[0].mxu0
        %v1285 = vadd.f32 %v1036, %v1284
        %v1286 = vpop.f32.mrb[0].mxu0
        %v1287 = vadd.f32 %v1040, %v1286
        %1288 = vmatprep.mubr.bf16.mxu0 0
        %1289 = vmatmul.mubr.bf16.gmra.mrb[0].mxu0 %v991
        %v1290 = vpop.f32.mrb[0].mxu0
        %v1291 = vadd.f32 %v1036, %v1290
        %v1292 = vpop.f32.mrb[0].mxu0
        %v1293 = vadd.f32 %v1040, %v1292
        %v1294 = vpop.f32.mrb[0].mxu0
        %v1295 = vadd.f32 %v1036, %v1294
        %v1296 = vpop.f32.mrb[0].mxu0
        %v1297 = vadd.f32 %v1040, %v1296
        %1298 = vmatprep.mubr.bf16.mxu0 0
        %1299 = vmatmul.mubr.bf16.gmra.mrb[0].mxu0 %v992
        %v1300 = vpop.f32.mrb[0].mxu0
        %v1301 = vadd.f32 %v1036, %v1300
        %v1302 = vpop.f32.mrb[0].mxu0
        %v1303 = vadd.f32 %v1040, %v1302
        %v1304 = vpop.f32.mrb[0].mxu0
        %v1305 = vadd.f32 %v1036, %v1304
        %v1306 = vpop.f32.mrb[0].mxu0
        %v1307 = vadd.f32 %v1040, %v1306
        %1308 = vmatprep.mubr.bf16.mxu0 0
        %1309 = vmatmul.mubr.bf16.gmra.mrb[0].mxu0 %v993
        %v1310 = vpop.f32.mrb[0].mxu0
        %v1311 = vadd.f32 %v1036, %v1310
        %v1312 = vpop.f32.mrb[0].mxu0
        %v1313 = vadd.f32 %v1040, %v1312
        %v1314 = vpop.f32.mrb[0].mxu0
        %v1315 = vadd.f32 %v1036, %v1314
        %v1316 = vpop.f32.mrb[0].mxu0
        %v1317 = vadd.f32 %v1040, %v1316
        %1318 = vmatprep.mubr.bf16.mxu0 0
        %1319 = vmatmul.mubr.bf16.gmra.mrb[0].mxu0 %v994
        %v1320 = vpop.f32.mrb[0].mxu0
        %v1321 = vadd.f32 %v1036, %v1320
        %v1322 = vpop.f32.mrb[0].mxu0
        %v1323 = vadd.f32 %v1040, %v1322
        %v1324 = vpop.f32.mrb[0].mxu0
        %v1325 = vadd.f32 %v1036, %v1324
        %v1326 = vpop.f32.mrb[0].mxu0
        %v1327 = vadd.f32 %v1040, %v1326
        %1328 = vmatprep.mubr.bf16.mxu0 0
        %1329 = vmatmul.mubr.bf16.gmra.mrb[0].mxu0 %v995
        %v1330 = vpop.f32.mrb[0].mxu0
        %v1331 = vadd.f32 %v1036, %v1330
        %v1332 = vpop.f32.mrb[0].mxu0
        %v1333 = vadd.f32 %v1040, %v1332
        %v1334 = vpop.f32.mrb[0].mxu0
        %v1335 = vadd.f32 %v1036, %v1334
        %v1336 = vpop.f32.mrb[0].mxu0
        %v1337 = vadd.f32 %v1040, %v1336
        %1338 = vmatprep.mubr.bf16.mxu0 0
        %1339 = vmatmul.mubr.bf16.gmra.mrb[0].mxu0 %v996
        %v1340 = vpop.f32.mrb[0].mxu0
        %v1341 = vadd.f32 %v1036, %v1340
        %v1342 = vpop.f32.mrb[0].mxu0
        %v1343 = vadd.f32 %v1040, %v1342
        %v1344 = vpop.f32.mrb[0].mxu0
        %v1345 = vadd.f32 %v1036, %v1344
        %v1346 = vpop.f32.mrb[0].mxu0
        %v1347 = vadd.f32 %v1040, %v1346
        %1348 = vmatprep.mubr.bf16.mxu0 0
        %1349 = vmatmul.mubr.bf16.gmra.mrb[0].mxu0 %v997
        %v1350 = vpop.f32.mrb[0].mxu0
        %v1351 = vadd.f32 %v1036, %v1350
        %v1352 = vpop.f32.mrb[0].mxu0
        %v1353 = vadd.f32 %v1040, %v1352
        %v1354 = vpop.f32.mrb[0].mxu0
        %v1355 = vadd.f32 %v1036, %v1354
        %v1356 = vpop.f32.mrb[0].mxu0
        %v1357 = vadd.f32 %v1040, %v1356
        %1358 = vmatprep.mubr.bf16.mxu0 0
        %1359 = vmatmul.mubr.bf16.gmra.mrb[0].mxu0 %v998
        %v1360 = vpop.f32.mrb[0].mxu0
        %v1361 = vadd.f32 %v1036, %v1360
        %v1362 = vpop.f32.mrb[0].mxu0
        %v1363 = vadd.f32 %v1040, %v1362
        %v1364 = vpop.f32.mrb[0].mxu0
        %v1365 = vadd.f32 %v1036, %v1364
        %v1366 = vpop.f32.mrb[0].mxu0
        %v1367 = vadd.f32 %v1040, %v1366
        %1368 = vdwg.mxu0
        %1369 = vmatprep.subr.bf16.mxu0 0
        %1370 = vmatpush1.bf16.msra.mxu0 %v1130
        %1371 = vmatprep.subr.bf16.mxu0 0
        %1372 = vmatpush1.bf16.msra.mxu0 %v1133
        %1373 = vmatprep.subr.bf16.mxu0 0
        %1374 = vmatpush1.bf16.msra.mxu0 %v1136
        %1375 = vmatprep.subr.bf16.mxu0 0
        %1376 = vmatpush1.bf16.msra.mxu0 %v1139
        %1377 = vmatprep.subr.bf16.mxu0 0
        %1378 = vmatpush1.bf16.msra.mxu0 %v1142
        %1379 = vmatprep.subr.bf16.mxu0 0
        %1380 = vmatpush1.bf16.msra.mxu0 %v1145
        %1381 = vmatprep.subr.bf16.mxu0 0
        %1382 = vmatpush1.bf16.msra.mxu0 %v1148
        %1383 = vmatprep.subr.bf16.mxu0 0
        %1384 = vmatpush1.bf16.msra.mxu0 %v1151
        %1385 = vmatprep.subr.bf16.mxu0 0
        %1386 = vmatpush1.bf16.msra.mxu0 0
        %1387 = vmatprep.subr.bf16.mxu0 0
        %1388 = vmatpush1.bf16.msra.mxu0 0
        %1389 = vmatprep.subr.bf16.mxu0 0
        %1390 = vmatpush1.bf16.msra.mxu0 0
        %1391 = vmatprep.subr.bf16.mxu0 0
        %1392 = vmatpush1.bf16.msra.mxu0 0
        %1393 = vmatprep.subr.bf16.mxu0 0
        %1394 = vmatpush1.bf16.msra.mxu0 0
        %1395 = vmatprep.subr.bf16.mxu0 0
        %1396 = vmatpush1.bf16.msra.mxu0 0
        %1397 = vmatprep.subr.bf16.mxu0 0
        %1398 = vmatpush1.bf16.msra.mxu0 0
        %1399 = vmatprep.subr.bf16.mxu0 0
        %1400 = vmatpush1.bf16.msra.mxu0 0
        %1401 = vmatprep.mubr.bf16.mxu0 0
        %1402 = vmatmul.mubr.bf16.gmra.mrb[0].mxu0 %v983
        %v1403 = vpop.f32.mrb[0].mxu0
        %v1404 = vadd.f32 %v1044, %v1403
        %v1405 = vpop.f32.mrb[0].mxu0
        %v1406 = vpop.f32.mrb[0].mxu0
        %v1407 = vadd.f32 %v1044, %v1406
        %v1408 = vpop.f32.mrb[0].mxu0
        %1409 = vmatprep.mubr.bf16.mxu0 0
        %1410 = vmatmul.mubr.bf16.gmra.mrb[0].mxu0 %v984
        %v1411 = vpop.f32.mrb[0].mxu0
        %v1412 = vadd.f32 %v1044, %v1411
        %v1413 = vpop.f32.mrb[0].mxu0
        %v1414 = vpop.f32.mrb[0].mxu0
        %v1415 = vadd.f32 %v1044, %v1414
        %v1416 = vpop.f32.mrb[0].mxu0
        %1417 = vmatprep.mubr.bf16.mxu0 0
        %1418 = vmatmul.mubr.bf16.gmra.mrb[0].mxu0 %v985
        %v1419 = vpop.f32.mrb[0].mxu0
        %v1420 = vadd.f32 %v1044, %v1419
        %v1421 = vpop.f32.mrb[0].mxu0
        %v1422 = vpop.f32.mrb[0].mxu0
        %v1423 = vadd.f32 %v1044, %v1422
        %v1424 = vpop.f32.mrb[0].mxu0
        %1425 = vmatprep.mubr.bf16.mxu0 0
        %1426 = vmatmul.mubr.bf16.gmra.mrb[0].mxu0 %v986
        %v1427 = vpop.f32.mrb[0].mxu0
        %v1428 = vadd.f32 %v1044, %v1427
        %v1429 = vpop.f32.mrb[0].mxu0
        %v1430 = vpop.f32.mrb[0].mxu0
        %v1431 = vadd.f32 %v1044, %v1430
        %v1432 = vpop.f32.mrb[0].mxu0
        %1433 = vmatprep.mubr.bf16.mxu0 0
        %1434 = vmatmul.mubr.bf16.gmra.mrb[0].mxu0 %v987
        %v1435 = vpop.f32.mrb[0].mxu0
        %v1436 = vadd.f32 %v1044, %v1435
        %v1437 = vpop.f32.mrb[0].mxu0
        %v1438 = vpop.f32.mrb[0].mxu0
        %v1439 = vadd.f32 %v1044, %v1438
        %v1440 = vpop.f32.mrb[0].mxu0
        %1441 = vmatprep.mubr.bf16.mxu0 0
        %1442 = vmatmul.mubr.bf16.gmra.mrb[0].mxu0 %v988
        %v1443 = vpop.f32.mrb[0].mxu0
        %v1444 = vadd.f32 %v1044, %v1443
        %v1445 = vpop.f32.mrb[0].mxu0
        %v1446 = vpop.f32.mrb[0].mxu0
        %v1447 = vadd.f32 %v1044, %v1446
        %v1448 = vpop.f32.mrb[0].mxu0
        %1449 = vmatprep.mubr.bf16.mxu0 0
        %1450 = vmatmul.mubr.bf16.gmra.mrb[0].mxu0 %v989
        %v1451 = vpop.f32.mrb[0].mxu0
        %v1452 = vadd.f32 %v1044, %v1451
        %v1453 = vpop.f32.mrb[0].mxu0
        %v1454 = vpop.f32.mrb[0].mxu0
        %v1455 = vadd.f32 %v1044, %v1454
        %v1456 = vpop.f32.mrb[0].mxu0
        %1457 = vmatprep.mubr.bf16.mxu0 0
        %1458 = vmatmul.mubr.bf16.gmra.mrb[0].mxu0 %v990
        %v1459 = vpop.f32.mrb[0].mxu0
        %v1460 = vadd.f32 %v1044, %v1459
        %v1461 = vpop.f32.mrb[0].mxu0
        %v1462 = vpop.f32.mrb[0].mxu0
        %v1463 = vadd.f32 %v1044, %v1462
        %v1464 = vpop.f32.mrb[0].mxu0
        %1465 = vmatprep.mubr.bf16.mxu0 0
        %1466 = vmatmul.mubr.bf16.gmra.mrb[0].mxu0 %v991
        %v1467 = vpop.f32.mrb[0].mxu0
        %v1468 = vadd.f32 %v1044, %v1467
        %v1469 = vpop.f32.mrb[0].mxu0
        %v1470 = vpop.f32.mrb[0].mxu0
        %v1471 = vadd.f32 %v1044, %v1470
        %v1472 = vpop.f32.mrb[0].mxu0
        %1473 = vmatprep.mubr.bf16.mxu0 0
        %1474 = vmatmul.mubr.bf16.gmra.mrb[0].mxu0 %v992
        %v1475 = vpop.f32.mrb[0].mxu0
        %v1476 = vadd.f32 %v1044, %v1475
        %v1477 = vpop.f32.mrb[0].mxu0
        %v1478 = vpop.f32.mrb[0].mxu0
        %v1479 = vadd.f32 %v1044, %v1478
        %v1480 = vpop.f32.mrb[0].mxu0
        %1481 = vmatprep.mubr.bf16.mxu0 0
        %1482 = vmatmul.mubr.bf16.gmra.mrb[0].mxu0 %v993
        %v1483 = vpop.f32.mrb[0].mxu0
        %v1484 = vadd.f32 %v1044, %v1483
        %v1485 = vpop.f32.mrb[0].mxu0
        %v1486 = vpop.f32.mrb[0].mxu0
        %v1487 = vadd.f32 %v1044, %v1486
        %v1488 = vpop.f32.mrb[0].mxu0
        %1489 = vmatprep.mubr.bf16.mxu0 0
        %1490 = vmatmul.mubr.bf16.gmra.mrb[0].mxu0 %v994
        %v1491 = vpop.f32.mrb[0].mxu0
        %v1492 = vadd.f32 %v1044, %v1491
        %v1493 = vpop.f32.mrb[0].mxu0
        %v1494 = vpop.f32.mrb[0].mxu0
        %v1495 = vadd.f32 %v1044, %v1494
        %v1496 = vpop.f32.mrb[0].mxu0
        %1497 = vmatprep.mubr.bf16.mxu0 0
        %1498 = vmatmul.mubr.bf16.gmra.mrb[0].mxu0 %v995
        %v1499 = vpop.f32.mrb[0].mxu0
        %v1500 = vadd.f32 %v1044, %v1499
        %v1501 = vpop.f32.mrb[0].mxu0
        %v1502 = vpop.f32.mrb[0].mxu0
        %v1503 = vadd.f32 %v1044, %v1502
        %v1504 = vpop.f32.mrb[0].mxu0
        %1505 = vmatprep.mubr.bf16.mxu0 0
        %1506 = vmatmul.mubr.bf16.gmra.mrb[0].mxu0 %v996
        %v1507 = vpop.f32.mrb[0].mxu0
        %v1508 = vadd.f32 %v1044, %v1507
        %v1509 = vpop.f32.mrb[0].mxu0
        %v1510 = vpop.f32.mrb[0].mxu0
        %v1511 = vadd.f32 %v1044, %v1510
        %v1512 = vpop.f32.mrb[0].mxu0
        %1513 = vmatprep.mubr.bf16.mxu0 0
        %1514 = vmatmul.mubr.bf16.gmra.mrb[0].mxu0 %v997
        %v1515 = vpop.f32.mrb[0].mxu0
        %v1516 = vadd.f32 %v1044, %v1515
        %v1517 = vpop.f32.mrb[0].mxu0
        %v1518 = vpop.f32.mrb[0].mxu0
        %v1519 = vadd.f32 %v1044, %v1518
        %v1520 = vpop.f32.mrb[0].mxu0
        %1521 = vmatprep.mubr.bf16.mxu0 0
        %1522 = vmatmul.mubr.bf16.gmra.mrb[0].mxu0 %v998
        %v1523 = vpop.f32.mrb[0].mxu0
        %v1524 = vadd.f32 %v1044, %v1523
        %v1525 = vpop.f32.mrb[0].mxu0
        %v1526 = vpop.f32.mrb[0].mxu0
        %v1527 = vadd.f32 %v1044, %v1526
        %v1528 = vpop.f32.mrb[0].mxu0
        %1529 = vdwg.mxu0
        %v1530 = vpack.c.bf16 %v1215, %v1211
        %v1531 = vpack.c.bf16 %v1225, %v1221
        %v1532 = vpack.c.bf16 %v1235, %v1231
        %v1533 = vpack.c.bf16 %v1245, %v1241
        %v1534 = vpack.c.bf16 %v1255, %v1251
        %v1535 = vpack.c.bf16 %v1265, %v1261
        %v1536 = vpack.c.bf16 %v1275, %v1271
        %v1537 = vpack.c.bf16 %v1285, %v1281
        %v1538 = vpack.c.bf16 %v1295, %v1291
        %v1539 = vpack.c.bf16 %v1305, %v1301
        %v1540 = vpack.c.bf16 %v1315, %v1311
        %v1541 = vpack.c.bf16 %v1325, %v1321
        %v1542 = vpack.c.bf16 %v1335, %v1331
        %v1543 = vpack.c.bf16 %v1345, %v1341
        %v1544 = vpack.c.bf16 %v1355, %v1351
        %v1545 = vpack.c.bf16 %v1365, %v1361
        %v1562 = vunpack.c.l.b16 %v1530
        %v1563 = vunpack.c.h.b16 %v1530
        %v1564 = vunpack.c.l.b16 %v1531
        %v1565 = vunpack.c.h.b16 %v1531
        %v1566 = vunpack.c.l.b16 %v1532
        %v1567 = vunpack.c.h.b16 %v1532
        %v1568 = vunpack.c.l.b16 %v1533
        %v1569 = vunpack.c.h.b16 %v1533
        %v1570 = vunpack.c.l.b16 %v1534
        %v1571 = vunpack.c.h.b16 %v1534
        %v1572 = vunpack.c.l.b16 %v1535
        %v1573 = vunpack.c.h.b16 %v1535
        %v1574 = vunpack.c.l.b16 %v1536
        %v1575 = vunpack.c.h.b16 %v1536
        %v1576 = vunpack.c.l.b16 %v1537
        %v1577 = vunpack.c.h.b16 %v1537
        %v1578 = vunpack.c.l.b16 %v1538
        %v1579 = vunpack.c.h.b16 %v1538
        %v1580 = vunpack.c.l.b16 %v1539
        %v1581 = vunpack.c.h.b16 %v1539
        %v1582 = vunpack.c.l.b16 %v1540
        %v1583 = vunpack.c.h.b16 %v1540
        %v1584 = vunpack.c.l.b16 %v1541
        %v1585 = vunpack.c.h.b16 %v1541
        %v1586 = vunpack.c.l.b16 %v1542
        %v1587 = vunpack.c.h.b16 %v1542
        %v1588 = vunpack.c.l.b16 %v1543
        %v1589 = vunpack.c.h.b16 %v1543
        %v1590 = vunpack.c.l.b16 %v1544
        %v1591 = vunpack.c.h.b16 %v1544
        %v1592 = vunpack.c.l.b16 %v1545
        %v1593 = vunpack.c.h.b16 %v1545
        %v1594 = vpack.c.b16 %v1562, %v1562
        %v1595 = vpack.c.b16 %v1563, %v1563
        %v1596 = vpack.c.b16 %v1564, %v1564
        %v1597 = vpack.c.b16 %v1565, %v1565
        %v1598 = vpack.c.b16 %v1566, %v1566
        %v1599 = vpack.c.b16 %v1567, %v1567
        %v1600 = vpack.c.b16 %v1568, %v1568
        %v1601 = vpack.c.b16 %v1569, %v1569
        %v1602 = vpack.c.b16 %v1570, %v1570
        %v1603 = vpack.c.b16 %v1571, %v1571
        %v1604 = vpack.c.b16 %v1572, %v1572
        %v1605 = vpack.c.b16 %v1573, %v1573
        %v1606 = vpack.c.b16 %v1574, %v1574
        %v1607 = vpack.c.b16 %v1575, %v1575
        %v1608 = vpack.c.b16 %v1576, %v1576
        %v1609 = vpack.c.b16 %v1577, %v1577
        %v1610 = vpack.c.b16 %v1578, %v1578
        %v1611 = vpack.c.b16 %v1579, %v1579
        %v1612 = vpack.c.b16 %v1580, %v1580
        %v1613 = vpack.c.b16 %v1581, %v1581
        %v1614 = vpack.c.b16 %v1582, %v1582
        %v1615 = vpack.c.b16 %v1583, %v1583
        %v1616 = vpack.c.b16 %v1584, %v1584
        %v1617 = vpack.c.b16 %v1585, %v1585
        %v1618 = vpack.c.b16 %v1586, %v1586
        %v1619 = vpack.c.b16 %v1587, %v1587
        %v1620 = vpack.c.b16 %v1588, %v1588
        %v1621 = vpack.c.b16 %v1589, %v1589
        %v1622 = vpack.c.b16 %v1590, %v1590
        %v1623 = vpack.c.b16 %v1591, %v1591
        %v1624 = vpack.c.b16 %v1592, %v1592
        %v1625 = vpack.c.b16 %v1593, %v1593
        %1658 = vst [vmem:[%s369] sm:$0xf] %v1594
        %1659 = vst [vmem:[%s369 + $0x4] sm:$0xf] %v1595
        %1660 = vst [vmem:[%s369 + $0x8] sm:$0xf] %v1596
        %1661 = vst [vmem:[%s369 + $0xc] sm:$0xf] %v1597
        %1662 = vst [vmem:[%s369 + $0x10] sm:$0xf] %v1598
        %1663 = vst [vmem:[%s369 + $0x14] sm:$0xf] %v1599
        %1664 = vst [vmem:[%s369 + $0x18] sm:$0xf] %v1600
        %1665 = vst [vmem:[%s369 + $0x1c] sm:$0xf] %v1601
        %1666 = vst [vmem:[%s369 + $0x20] sm:$0xf] %v1602
        %1667 = vst [vmem:[%s369 + $0x24] sm:$0xf] %v1603
        %1668 = vst [vmem:[%s369 + $0x28] sm:$0xf] %v1604
        %1669 = vst [vmem:[%s369 + $0x2c] sm:$0xf] %v1605
        %1670 = vst [vmem:[%s369 + $0x30] sm:$0xf] %v1606
        %1671 = vst [vmem:[%s369 + $0x34] sm:$0xf] %v1607
        %1672 = vst [vmem:[%s369 + $0x38] sm:$0xf] %v1608
        %1673 = vst [vmem:[%s369 + $0x3c] sm:$0xf] %v1609
        %1674 = vst [vmem:[%s369 + $0x40] sm:$0xf] %v1610
        %1675 = vst [vmem:[%s369 + $0x44] sm:$0xf] %v1611
        %1676 = vst [vmem:[%s369 + $0x48] sm:$0xf] %v1612
        %1677 = vst [vmem:[%s369 + $0x4c] sm:$0xf] %v1613
        %1678 = vst [vmem:[%s369 + $0x50] sm:$0xf] %v1614
        %1679 = vst [vmem:[%s369 + $0x54] sm:$0xf] %v1615
        %1680 = vst [vmem:[%s369 + $0x58] sm:$0xf] %v1616
        %1681 = vst [vmem:[%s369 + $0x5c] sm:$0xf] %v1617
        %1682 = vst [vmem:[%s369 + $0x60] sm:$0xf] %v1618
        %1683 = vst [vmem:[%s369 + $0x64] sm:$0xf] %v1619
        %1684 = vst [vmem:[%s369 + $0x68] sm:$0xf] %v1620
        %1685 = vst [vmem:[%s369 + $0x6c] sm:$0xf] %v1621
        %1686 = vst [vmem:[%s369 + $0x70] sm:$0xf] %v1622
        %1687 = vst [vmem:[%s369 + $0x74] sm:$0xf] %v1623
        %1688 = vst [vmem:[%s369 + $0x78] sm:$0xf] %v1624
        %1689 = vst [vmem:[%s369 + $0x7c] sm:$0xf] %v1625
        %v1690 = vpack.c.bf16 %v1217, %v1213
        %v1691 = vpack.c.bf16 %v1227, %v1223
        %v1692 = vpack.c.bf16 %v1237, %v1233
        %v1693 = vpack.c.bf16 %v1247, %v1243
        %v1694 = vpack.c.bf16 %v1257, %v1253
        %v1695 = vpack.c.bf16 %v1267, %v1263
        %v1696 = vpack.c.bf16 %v1277, %v1273
        %v1697 = vpack.c.bf16 %v1287, %v1283
        %v1698 = vpack.c.bf16 %v1297, %v1293
        %v1699 = vpack.c.bf16 %v1307, %v1303
        %v1700 = vpack.c.bf16 %v1317, %v1313
        %v1701 = vpack.c.bf16 %v1327, %v1323
        %v1702 = vpack.c.bf16 %v1337, %v1333
        %v1703 = vpack.c.bf16 %v1347, %v1343
        %v1704 = vpack.c.bf16 %v1357, %v1353
        %v1705 = vpack.c.bf16 %v1367, %v1363
        %v1722 = vunpack.c.l.b16 %v1690
        %v1723 = vunpack.c.h.b16 %v1690
        %v1724 = vunpack.c.l.b16 %v1691
        %v1725 = vunpack.c.h.b16 %v1691
        %v1726 = vunpack.c.l.b16 %v1692
        %v1727 = vunpack.c.h.b16 %v1692
        %v1728 = vunpack.c.l.b16 %v1693
        %v1729 = vunpack.c.h.b16 %v1693
        %v1730 = vunpack.c.l.b16 %v1694
        %v1731 = vunpack.c.h.b16 %v1694
        %v1732 = vunpack.c.l.b16 %v1695
        %v1733 = vunpack.c.h.b16 %v1695
        %v1734 = vunpack.c.l.b16 %v1696
        %v1735 = vunpack.c.h.b16 %v1696
        %v1736 = vunpack.c.l.b16 %v1697
        %v1737 = vunpack.c.h.b16 %v1697
        %v1738 = vunpack.c.l.b16 %v1698
        %v1739 = vunpack.c.h.b16 %v1698
        %v1740 = vunpack.c.l.b16 %v1699
        %v1741 = vunpack.c.h.b16 %v1699
        %v1742 = vunpack.c.l.b16 %v1700
        %v1743 = vunpack.c.h.b16 %v1700
        %v1744 = vunpack.c.l.b16 %v1701
        %v1745 = vunpack.c.h.b16 %v1701
        %v1746 = vunpack.c.l.b16 %v1702
        %v1747 = vunpack.c.h.b16 %v1702
        %v1748 = vunpack.c.l.b16 %v1703
        %v1749 = vunpack.c.h.b16 %v1703
        %v1750 = vunpack.c.l.b16 %v1704
        %v1751 = vunpack.c.h.b16 %v1704
        %v1752 = vunpack.c.l.b16 %v1705
        %v1753 = vunpack.c.h.b16 %v1705
        %v1754 = vpack.c.b16 %v1722, %v1722
        %v1755 = vpack.c.b16 %v1723, %v1723
        %v1756 = vpack.c.b16 %v1724, %v1724
        %v1757 = vpack.c.b16 %v1725, %v1725
        %v1758 = vpack.c.b16 %v1726, %v1726
        %v1759 = vpack.c.b16 %v1727, %v1727
        %v1760 = vpack.c.b16 %v1728, %v1728
        %v1761 = vpack.c.b16 %v1729, %v1729
        %v1762 = vpack.c.b16 %v1730, %v1730
        %v1763 = vpack.c.b16 %v1731, %v1731
        %v1764 = vpack.c.b16 %v1732, %v1732
        %v1765 = vpack.c.b16 %v1733, %v1733
        %v1766 = vpack.c.b16 %v1734, %v1734
        %v1767 = vpack.c.b16 %v1735, %v1735
        %v1768 = vpack.c.b16 %v1736, %v1736
        %v1769 = vpack.c.b16 %v1737, %v1737
        %v1770 = vpack.c.b16 %v1738, %v1738
        %v1771 = vpack.c.b16 %v1739, %v1739
        %v1772 = vpack.c.b16 %v1740, %v1740
        %v1773 = vpack.c.b16 %v1741, %v1741
        %v1774 = vpack.c.b16 %v1742, %v1742
        %v1775 = vpack.c.b16 %v1743, %v1743
        %v1776 = vpack.c.b16 %v1744, %v1744
        %v1777 = vpack.c.b16 %v1745, %v1745
        %v1778 = vpack.c.b16 %v1746, %v1746
        %v1779 = vpack.c.b16 %v1747, %v1747
        %v1780 = vpack.c.b16 %v1748, %v1748
        %v1781 = vpack.c.b16 %v1749, %v1749
        %v1782 = vpack.c.b16 %v1750, %v1750
        %v1783 = vpack.c.b16 %v1751, %v1751
        %v1784 = vpack.c.b16 %v1752, %v1752
        %v1785 = vpack.c.b16 %v1753, %v1753
        %1818 = vst [vmem:[%s376] sm:$0xf] %v1754
        %1819 = vst [vmem:[%s376 + $0x4] sm:$0xf] %v1755
        %1820 = vst [vmem:[%s376 + $0x8] sm:$0xf] %v1756
        %1821 = vst [vmem:[%s376 + $0xc] sm:$0xf] %v1757
        %1822 = vst [vmem:[%s376 + $0x10] sm:$0xf] %v1758
        %1823 = vst [vmem:[%s376 + $0x14] sm:$0xf] %v1759
        %1824 = vst [vmem:[%s376 + $0x18] sm:$0xf] %v1760
        %1825 = vst [vmem:[%s376 + $0x1c] sm:$0xf] %v1761
        %1826 = vst [vmem:[%s376 + $0x20] sm:$0xf] %v1762
        %1827 = vst [vmem:[%s376 + $0x24] sm:$0xf] %v1763
        %1828 = vst [vmem:[%s376 + $0x28] sm:$0xf] %v1764
        %1829 = vst [vmem:[%s376 + $0x2c] sm:$0xf] %v1765
        %1830 = vst [vmem:[%s376 + $0x30] sm:$0xf] %v1766
        %1831 = vst [vmem:[%s376 + $0x34] sm:$0xf] %v1767
        %1832 = vst [vmem:[%s376 + $0x38] sm:$0xf] %v1768
        %1833 = vst [vmem:[%s376 + $0x3c] sm:$0xf] %v1769
        %1834 = vst [vmem:[%s376 + $0x40] sm:$0xf] %v1770
        %1835 = vst [vmem:[%s376 + $0x44] sm:$0xf] %v1771
        %1836 = vst [vmem:[%s376 + $0x48] sm:$0xf] %v1772
        %1837 = vst [vmem:[%s376 + $0x4c] sm:$0xf] %v1773
        %1838 = vst [vmem:[%s376 + $0x50] sm:$0xf] %v1774
        %1839 = vst [vmem:[%s376 + $0x54] sm:$0xf] %v1775
        %1840 = vst [vmem:[%s376 + $0x58] sm:$0xf] %v1776
        %1841 = vst [vmem:[%s376 + $0x5c] sm:$0xf] %v1777
        %1842 = vst [vmem:[%s376 + $0x60] sm:$0xf] %v1778
        %1843 = vst [vmem:[%s376 + $0x64] sm:$0xf] %v1779
        %1844 = vst [vmem:[%s376 + $0x68] sm:$0xf] %v1780
        %1845 = vst [vmem:[%s376 + $0x6c] sm:$0xf] %v1781
        %1846 = vst [vmem:[%s376 + $0x70] sm:$0xf] %v1782
        %1847 = vst [vmem:[%s376 + $0x74] sm:$0xf] %v1783
        %1848 = vst [vmem:[%s376 + $0x78] sm:$0xf] %v1784
        %1849 = vst [vmem:[%s376 + $0x7c] sm:$0xf] %v1785
        %v1850 = vpack.c.bf16 %v1407, %v1404
        %v1851 = vpack.c.bf16 %v1415, %v1412
        %v1852 = vpack.c.bf16 %v1423, %v1420
        %v1853 = vpack.c.bf16 %v1431, %v1428
        %v1854 = vpack.c.bf16 %v1439, %v1436
        %v1855 = vpack.c.bf16 %v1447, %v1444
        %v1856 = vpack.c.bf16 %v1455, %v1452
        %v1857 = vpack.c.bf16 %v1463, %v1460
        %v1858 = vpack.c.bf16 %v1471, %v1468
        %v1859 = vpack.c.bf16 %v1479, %v1476
        %v1860 = vpack.c.bf16 %v1487, %v1484
        %v1861 = vpack.c.bf16 %v1495, %v1492
        %v1862 = vpack.c.bf16 %v1503, %v1500
        %v1863 = vpack.c.bf16 %v1511, %v1508
        %v1864 = vpack.c.bf16 %v1519, %v1516
        %v1865 = vpack.c.bf16 %v1527, %v1524
        %v1882 = vunpack.c.l.b16 %v1850
        %v1883 = vunpack.c.h.b16 %v1850
        %v1884 = vunpack.c.l.b16 %v1851
        %v1885 = vunpack.c.h.b16 %v1851
        %v1886 = vunpack.c.l.b16 %v1852
        %v1887 = vunpack.c.h.b16 %v1852
        %v1888 = vunpack.c.l.b16 %v1853
        %v1889 = vunpack.c.h.b16 %v1853
        %v1890 = vunpack.c.l.b16 %v1854
        %v1891 = vunpack.c.h.b16 %v1854
        %v1892 = vunpack.c.l.b16 %v1855
        %v1893 = vunpack.c.h.b16 %v1855
        %v1894 = vunpack.c.l.b16 %v1856
        %v1895 = vunpack.c.h.b16 %v1856
        %v1896 = vunpack.c.l.b16 %v1857
        %v1897 = vunpack.c.h.b16 %v1857
        %v1898 = vunpack.c.l.b16 %v1858
        %v1899 = vunpack.c.h.b16 %v1858
        %v1900 = vunpack.c.l.b16 %v1859
        %v1901 = vunpack.c.h.b16 %v1859
        %v1902 = vunpack.c.l.b16 %v1860
        %v1903 = vunpack.c.h.b16 %v1860
        %v1904 = vunpack.c.l.b16 %v1861
        %v1905 = vunpack.c.h.b16 %v1861
        %v1906 = vunpack.c.l.b16 %v1862
        %v1907 = vunpack.c.h.b16 %v1862
        %v1908 = vunpack.c.l.b16 %v1863
        %v1909 = vunpack.c.h.b16 %v1863
        %v1910 = vunpack.c.l.b16 %v1864
        %v1911 = vunpack.c.h.b16 %v1864
        %v1912 = vunpack.c.l.b16 %v1865
        %v1913 = vunpack.c.h.b16 %v1865
        %v1914 = vpack.c.b16 %v1882, %v1882
        %v1915 = vpack.c.b16 %v1883, %v1883
        %v1916 = vpack.c.b16 %v1884, %v1884
        %v1917 = vpack.c.b16 %v1885, %v1885
        %v1918 = vpack.c.b16 %v1886, %v1886
        %v1919 = vpack.c.b16 %v1887, %v1887
        %v1920 = vpack.c.b16 %v1888, %v1888
        %v1921 = vpack.c.b16 %v1889, %v1889
        %v1922 = vpack.c.b16 %v1890, %v1890
        %v1923 = vpack.c.b16 %v1891, %v1891
        %v1924 = vpack.c.b16 %v1892, %v1892
        %v1925 = vpack.c.b16 %v1893, %v1893
        %v1926 = vpack.c.b16 %v1894, %v1894
        %v1927 = vpack.c.b16 %v1895, %v1895
        %v1928 = vpack.c.b16 %v1896, %v1896
        %v1929 = vpack.c.b16 %v1897, %v1897
        %v1930 = vpack.c.b16 %v1898, %v1898
        %v1931 = vpack.c.b16 %v1899, %v1899
        %v1932 = vpack.c.b16 %v1900, %v1900
        %v1933 = vpack.c.b16 %v1901, %v1901
        %v1934 = vpack.c.b16 %v1902, %v1902
        %v1935 = vpack.c.b16 %v1903, %v1903
        %v1936 = vpack.c.b16 %v1904, %v1904
        %v1937 = vpack.c.b16 %v1905, %v1905
        %v1938 = vpack.c.b16 %v1906, %v1906
        %v1939 = vpack.c.b16 %v1907, %v1907
        %v1940 = vpack.c.b16 %v1908, %v1908
        %v1941 = vpack.c.b16 %v1909, %v1909
        %v1942 = vpack.c.b16 %v1910, %v1910
        %v1943 = vpack.c.b16 %v1911, %v1911
        %v1944 = vpack.c.b16 %v1912, %v1912
        %v1945 = vpack.c.b16 %v1913, %v1913
        %1978 = vst [vmem:[%s383] sm:$0xf] %v1914
        %1979 = vst [vmem:[%s383 + $0x4] sm:$0xf] %v1915
        %1980 = vst [vmem:[%s383 + $0x8] sm:$0xf] %v1916
        %1981 = vst [vmem:[%s383 + $0xc] sm:$0xf] %v1917
        %1982 = vst [vmem:[%s383 + $0x10] sm:$0xf] %v1918
        %1983 = vst [vmem:[%s383 + $0x14] sm:$0xf] %v1919
        %1984 = vst [vmem:[%s383 + $0x18] sm:$0xf] %v1920
        %1985 = vst [vmem:[%s383 + $0x1c] sm:$0xf] %v1921
        %1986 = vst [vmem:[%s383 + $0x20] sm:$0xf] %v1922
        %1987 = vst [vmem:[%s383 + $0x24] sm:$0xf] %v1923
        %1988 = vst [vmem:[%s383 + $0x28] sm:$0xf] %v1924
        %1989 = vst [vmem:[%s383 + $0x2c] sm:$0xf] %v1925
        %1990 = vst [vmem:[%s383 + $0x30] sm:$0xf] %v1926
        %1991 = vst [vmem:[%s383 + $0x34] sm:$0xf] %v1927
        %1992 = vst [vmem:[%s383 + $0x38] sm:$0xf] %v1928
        %1993 = vst [vmem:[%s383 + $0x3c] sm:$0xf] %v1929
        %1994 = vst [vmem:[%s383 + $0x40] sm:$0xf] %v1930
        %1995 = vst [vmem:[%s383 + $0x44] sm:$0xf] %v1931
        %1996 = vst [vmem:[%s383 + $0x48] sm:$0xf] %v1932
        %1997 = vst [vmem:[%s383 + $0x4c] sm:$0xf] %v1933
        %1998 = vst [vmem:[%s383 + $0x50] sm:$0xf] %v1934
        %1999 = vst [vmem:[%s383 + $0x54] sm:$0xf] %v1935
        %2000 = vst [vmem:[%s383 + $0x58] sm:$0xf] %v1936
        %2001 = vst [vmem:[%s383 + $0x5c] sm:$0xf] %v1937
        %2002 = vst [vmem:[%s383 + $0x60] sm:$0xf] %v1938
        %2003 = vst [vmem:[%s383 + $0x64] sm:$0xf] %v1939
        %2004 = vst [vmem:[%s383 + $0x68] sm:$0xf] %v1940
        %2005 = vst [vmem:[%s383 + $0x6c] sm:$0xf] %v1941
        %2006 = vst [vmem:[%s383 + $0x70] sm:$0xf] %v1942
        %2007 = vst [vmem:[%s383 + $0x74] sm:$0xf] %v1943
        %2008 = vst [vmem:[%s383 + $0x78] sm:$0xf] %v1944
        %2009 = vst [vmem:[%s383 + $0x7c] sm:$0xf] %v1945
        %s2010 = sand.u32 %s191, 1
        %s2011 = scalar_lea.sflag [#allocation4], %s2010
        %s2012 = sand.u32 %s191, 1
        %s2013 = smul.addr %s2012, 128
        %s2014 = scalar_lea.vmem [#allocation7], %s2013
        %s2015 = sand.u32 %s31, 1
        %s2016 = scalar_lea.sflag [#allocation9], %s2015
        %s2017 = sand.u32 %s217, 1
        %s2018 = smul.addr %s2017, 128
        %s2019 = scalar_lea.vmem [#allocation8], %s2018
        %s2020 = sand.u32 %s31, 1
        %s2021 = scalar_lea.sflag [#allocation9], %s2020
        %s2022 = sand.u32 %s243, 1
        %s2023 = smul.addr %s2022, 128
        %s2024 = scalar_lea.vmem [#allocation10], %s2023
        // Predicated region
        $region57: #{tpu_custom_call.1} parent=47 // pred_check
          %p2025 = pneg %p201
        $region58: #{tpu_custom_call.1} parent=47 // pred_check_branch
          %2027 = sbr.rel (%p2025) target = $region60
        $region59: #{tpu_custom_call.1} parent=47 // pred_region
          %s2029 = ssub.s32 2048, 2048
          %2030 = vsyncadd %s2011, %s2029
          %s2031 = smul.addr %s31, 32
          %s2032 = smul.addr %s2031, 64
          %s2033 = scalar_lea.hbm %s7, %s2032
          %s2034 = sshll.u32 %s2014, 4
          %s2035 = int_to_ptr.vmem [resolvable:$true] %s2034
          %2040 = dma.vmem_to_hbm [thread:$0]  %s2035, 2048, %s2033, %s2011, 64, 64, 4
        $region60: #{tpu_custom_call.1} parent=47 // pred_fallthru
          _
        // Predicated region
        $region61: #{tpu_custom_call.1} parent=47 // pred_check
          %p2041 = pneg %p227
        $region62: #{tpu_custom_call.1} parent=47 // pred_check_branch
          %2043 = sbr.rel (%p2041) target = $region64
        $region63: #{tpu_custom_call.1} parent=47 // pred_region
          %s2045 = ssub.s32 2048, 2048
          %2046 = vsyncadd %s2016, %s2045
          %s2047 = smul.addr %s31, 32
          %s2048 = smul.addr %s2047, 64
          %s2049 = scalar_lea.hbm %s8, %s2048
          %s2050 = sshll.u32 %s2019, 4
          %s2051 = int_to_ptr.vmem [resolvable:$true] %s2050
          %2056 = dma.vmem_to_hbm [thread:$0]  %s2051, 2048, %s2049, %s2016, 64, 64, 4
        $region64: #{tpu_custom_call.1} parent=47 // pred_fallthru
          _
        // Predicated region
        $region65: #{tpu_custom_call.1} parent=47 // pred_check
          %p2057 = pneg %p253
        $region66: #{tpu_custom_call.1} parent=47 // pred_check_branch
          %2059 = sbr.rel (%p2057) target = $region68
        $region67: #{tpu_custom_call.1} parent=47 // pred_region
          %s2061 = ssub.s32 2048, 2048
          %2062 = vsyncadd %s2021, %s2061
          %s2063 = smul.addr %s31, 32
          %s2064 = smul.addr %s2063, 64
          %s2065 = scalar_lea.hbm %s9, %s2064
          %s2066 = sshll.u32 %s2024, 4
          %s2067 = int_to_ptr.vmem [resolvable:$true] %s2066
          %2072 = dma.vmem_to_hbm [thread:$0]  %s2067, 2048, %s2065, %s2021, 64, 64, 4
        $region68: #{tpu_custom_call.1} parent=47 // pred_fallthru
          _
      $region48: #{tpu_custom_call.1} parent=5 // pred_fallthru
        _
      %p2073 = scmp.le.s32.totalorder 2, %s26
      // Predicated region
      $region69: #{tpu_custom_call.1} parent=5 // pred_check
        %p2074 = pneg %p2073
      $region70: #{tpu_custom_call.1} parent=5 // pred_check_branch
        %2076 = sbr.rel (%p2074) target = $region72
      $region71: #{tpu_custom_call.1} parent=5 // pred_region
        %s2077 = ssub.s32 %s26, 2
        // Predicated region
        $region73: #{tpu_custom_call.1} parent=71 // pred_check
          %p2078 = pneg %p207
        $region74: #{tpu_custom_call.1} parent=71 // pred_check_branch
          %2080 = sbr.rel (%p2078) target = $region76
        $region75: #{tpu_custom_call.1} parent=71 // pred_region
          %s2081 = sand.u32 %s192, 1
          %s2082 = scalar_lea.sflag [#allocation4], %s2081
          %s2083 = sand.u32 %s192, 1
          %s2084 = smul.addr %s2083, 128
          %s2085 = scalar_lea.vmem [#allocation7], %s2084
          %2086 = dma.done %s2082, 2048
        $region76: #{tpu_custom_call.1} parent=71 // pred_fallthru
          _
        // Predicated region
        $region77: #{tpu_custom_call.1} parent=71 // pred_check
          %p2087 = pneg %p233
        $region78: #{tpu_custom_call.1} parent=71 // pred_check_branch
          %2089 = sbr.rel (%p2087) target = $region80
        $region79: #{tpu_custom_call.1} parent=71 // pred_region
          %s2090 = sand.u32 %s32, 1
          %s2091 = scalar_lea.sflag [#allocation9], %s2090
          %s2092 = sand.u32 %s218, 1
          %s2093 = smul.addr %s2092, 128
          %s2094 = scalar_lea.vmem [#allocation8], %s2093
          %2095 = dma.done %s2091, 2048
        $region80: #{tpu_custom_call.1} parent=71 // pred_fallthru
          _
        // Predicated region
        $region81: #{tpu_custom_call.1} parent=71 // pred_check
          %p2096 = pneg %p259
        $region82: #{tpu_custom_call.1} parent=71 // pred_check_branch
          %2098 = sbr.rel (%p2096) target = $region84
        $region83: #{tpu_custom_call.1} parent=71 // pred_region
          %s2099 = sand.u32 %s32, 1
          %s2100 = scalar_lea.sflag [#allocation9], %s2099
          %s2101 = sand.u32 %s244, 1
          %s2102 = smul.addr %s2101, 128
          %s2103 = scalar_lea.vmem [#allocation10], %s2102
          %2104 = dma.done %s2100, 2048
        $region84: #{tpu_custom_call.1} parent=71 // pred_fallthru
          _
      $region72: #{tpu_custom_call.1} parent=5 // pred_fallthru
        _
    $region6: #{tpu_custom_call.1} parent=1 // loop_footer
      %s30 = sadd.s32 1, %s26
    $region7: #{tpu_custom_call.1} parent=1 // loop_footer_branch
      %25 = sbr.rel target = $region3
    $region8: #{tpu_custom_call.1} parent=1 // loop_exit
      _
    %2105 = vsyncpa [#allocation3], 1
    %s2106 = scalar_lea.sflag [#allocation3], 1
    %2107 = vsyncpa %s2106, 1
    %2108 = vsyncpa [#allocation6], 1
    %2109 = vsyncpa [#allocation4], 1
    %s2110 = scalar_lea.sflag [#allocation4], 1
    %2111 = vsyncpa %s2110, 1
    %2112 = vsyncpa [#allocation9], 1
    %s2113 = scalar_lea.sflag [#allocation9], 1
    %2114 = vsyncpa %s2113, 1

</llo_original>
